<compile_context>
chip_gen: v6e
topology: v6e:2x2x1
jax: 0.10.0
libtpu: 0.0.40
codegen_flags: <defaults>
</compile_context>

<pallas_src>
import jax
import jax.numpy as jnp
from jax.experimental import pallas as pl
from jax.experimental.pallas import tpu as pltpu

# ---- model dims (small, consistent with the module) -------------------------
INPUT_SIZE = 4          # len(df.columns) - 1  -> ['month','day','weekday','sales']
HIDDEN = 128            # module uses 1024; scaled down, kept lane-aligned (128)
FC1 = 128
NUM_CLASSES = 14        # predict_days
NUM_LAYERS = 1
BATCH = 2
SEQ = 8


def _lstm_kernel(x_ref, wih_ref, whh_ref, b_ref,
                 w1_ref, b1_ref, w2_ref, b2_ref,
                 out_ref, gx_ref):
    """Whole forward pass in VMEM.

    x_ref:  (T*Bp, I)   time-major, batch-padded, flattened input
    wih_ref:(I, 4H)     input->gates weights, f32, (i,f,o,g) column order
    whh_ref:(H, 4H)     hidden->gates weights, bf16, (i,f,o,g) column order
    b_ref:  (1, 4H)     b_ih + b_hh combined, f32, (i,f,o,g) order
    w1_ref: (H, FC1), b1_ref: (1, FC1)
    w2_ref: (FC1, Cp), b2_ref: (1, Cp)   (classes zero-padded to Cp lanes)
    out_ref:(Bp, Cp)
    gx_ref: (T*Bp, 4H) f32 scratch holding the precomputed x-projection.
    """
    Bp = out_ref.shape[0]
    H = whh_ref.shape[0]
    T = x_ref.shape[0] // Bp

    # Hoisted input projection: one matmul for all timesteps, bias folded in.
    gx_ref[...] = (
        jnp.dot(x_ref[...], wih_ref[...], preferred_element_type=jnp.float32)
        + b_ref[...]
    )

    # Recurrence: h, c stay in vregs; loop fully unrolled (T static, tiny).
    h = jnp.zeros((Bp, H), jnp.float32)
    c = jnp.zeros((Bp, H), jnp.float32)
    for t in range(T):
        gates = gx_ref[pl.ds(t * Bp, Bp), :] + jnp.dot(
            h.astype(whh_ref.dtype), whh_ref[...],
            preferred_element_type=jnp.float32)            # (Bp, 4H) f32 acc
        # Packed gate order is (i, f, o, g): one sigmoid + one tanh per step.
        ifo = jax.nn.sigmoid(gates[:, :3 * H])
        g_g = jnp.tanh(gates[:, 3 * H:])
        i_g = ifo[:, 0 * H:1 * H]
        f_g = ifo[:, 1 * H:2 * H]
        o_g = ifo[:, 2 * H:3 * H]
        c = f_g * c + i_g * g_g
        h = o_g * jnp.tanh(c)

    # hn -> relu -> fc_1 -> relu -> fc_2 (output lanes padded to Cp).
    z = jnp.maximum(h, 0.0)
    z = jnp.maximum(
        jnp.dot(z, w1_ref[...], preferred_element_type=jnp.float32) + b1_ref[...],
        0.0)
    z = jnp.dot(z, w2_ref[...], preferred_element_type=jnp.float32) + b2_ref[...]
    out_ref[...] = z.astype(out_ref.dtype)


def lstm_forward(x, params):
    """x: (B, T, I) float32 (PyTorch batch_first layout). Returns (B, NUM_CLASSES)."""
    wih, whh, b, w1, b1, w2, b2 = params
    B, T, I = x.shape
    H = HIDDEN

    # Pad batch to a full f32 sublane group (>=8) and classes to a full lane
    # group (128) so all kernel slices/stores are (8,128)-aligned / lane-dense.
    Bp = max(8, ((B + 7) // 8) * 8)
    Cp = max(128, ((NUM_CLASSES + 127) // 128) * 128)

    # PyTorch packed gate order (i,f,g,o) -> kernel order (i,f,o,g) so the
    # three sigmoids fuse into one call over the leading 3H columns.
    perm = jnp.concatenate([jnp.arange(0, H), jnp.arange(H, 2 * H),
                            jnp.arange(3 * H, 4 * H), jnp.arange(2 * H, 3 * H)])
    wih_p = jnp.take(wih, perm, axis=1)
    whh_p = jnp.take(whh, perm, axis=1).astype(jnp.bfloat16)   # MXU operand only
    b_p = jnp.take(b, perm, axis=1)

    # Time-major, batch-padded, flattened input: row t*Bp + n == x_pad[n, t, :].
    x_pad = jnp.zeros((Bp, T, I), jnp.float32).at[:B].set(x)
    x_tm = jnp.transpose(x_pad, (1, 0, 2)).reshape(T * Bp, I)

    # Lane-dense padded fc_2 (extra columns are zero -> math unchanged).
    w2_p = jnp.zeros((FC1, Cp), jnp.float32).at[:, :NUM_CLASSES].set(w2)
    b2_p = jnp.zeros((1, Cp), jnp.float32).at[:, :NUM_CLASSES].set(b2)

    vmem = pl.BlockSpec(memory_space=pltpu.MemorySpace.VMEM)
    out = pl.pallas_call(
        _lstm_kernel,
        out_shape=jax.ShapeDtypeStruct((Bp, Cp), jnp.float32),
        in_specs=[vmem] * 8,
        out_specs=vmem,
        scratch_shapes=[
            pltpu.VMEM((T * Bp, 4 * H), jnp.float32),   # precomputed x-gates
        ],
    )(x_tm, wih_p, whh_p, b_p, w1, b1, w2_p, b2_p)
    return out[:B, :NUM_CLASSES]


def init_params(key):
    """Deterministic parameter init (uniform +-1/sqrt(H), like nn.LSTM/nn.Linear).

    Weights are stored pre-transposed as (in_features, out_features); the
    packed 4H axis uses the PyTorch gate order (i, f, g, o).
    """
    ks = jax.random.split(key, 8)
    bound = 1.0 / jnp.sqrt(jnp.float32(HIDDEN))

    def u(k, shape, b):
        return jax.random.uniform(k, shape, jnp.float32, -b, b)

    wih = u(ks[0], (INPUT_SIZE, 4 * HIDDEN), bound)            # W_ih^T
    whh = u(ks[1], (HIDDEN, 4 * HIDDEN), bound)                # W_hh^T
    b_ih = u(ks[2], (1, 4 * HIDDEN), bound)
    b_hh = u(ks[3], (1, 4 * HIDDEN), bound)
    b = b_ih + b_hh

    b1_bound = 1.0 / jnp.sqrt(jnp.float32(HIDDEN))
    w1 = u(ks[4], (HIDDEN, FC1), b1_bound)
    b1 = u(ks[5], (1, FC1), b1_bound)

    b2_bound = 1.0 / jnp.sqrt(jnp.float32(FC1))
    w2 = u(ks[6], (FC1, NUM_CLASSES), b2_bound)
    b2 = u(ks[7], (1, NUM_CLASSES), b2_bound)
    return (wih, whh, b, w1, b1, w2, b2)


def lstm_forward_ref(x, params):
    """Pure-JAX f32 reference of the module forward (PyTorch i,f,g,o order)."""
    wih, whh, b, w1, b1, w2, b2 = params
    B, T, I = x.shape
    H = HIDDEN
    h = jnp.zeros((B, H), jnp.float32)
    c = jnp.zeros((B, H), jnp.float32)
    for t in range(T):
        gates = x[:, t, :] @ wih + h @ whh + b
        i_g = jax.nn.sigmoid(gates[:, 0 * H:1 * H])
        f_g = jax.nn.sigmoid(gates[:, 1 * H:2 * H])
        g_g = jnp.tanh(gates[:, 2 * H:3 * H])
        o_g = jax.nn.sigmoid(gates[:, 3 * H:4 * H])
        c = f_g * c + i_g * g_g
        h = o_g * jnp.tanh(c)
    z = jnp.maximum(h, 0.0)
    z = jnp.maximum(z @ w1 + b1, 0.0)
    return z @ w2 + b2


if __name__ == "__main__":
    key = jax.random.PRNGKey(0)
    kx, kp = jax.random.split(key)
    x = jax.random.normal(kx, (BATCH, SEQ, INPUT_SIZE), jnp.float32)
    params = init_params(kp)

    out = jax.block_until_ready(jax.jit(lstm_forward)(x, params))
    ref = jax.block_until_ready(lstm_forward_ref(x, params))

    assert out.shape == (BATCH, NUM_CLASSES), out.shape
    # bf16 W_hh on the MXU (f32 accumulation) -> tolerance relaxed from 1e-4.
    assert jnp.allclose(out, ref, atol=2e-2, rtol=2e-2), float(jnp.max(jnp.abs(out - ref)))
    print("KERNEL_OK")
</pallas_src>

<mosaic_0001>
module attributes {stable_mosaic.version = 11 : i64} {
  func.func @_lstm_kernel(%arg0: memref<64x4xf32, #tpu.memory_space<vmem>>, %arg1: memref<4x512xf32, #tpu.memory_space<vmem>>, %arg2: memref<128x512xbf16, #tpu.memory_space<vmem>>, %arg3: memref<1x512xf32, #tpu.memory_space<vmem>>, %arg4: memref<128x128xf32, #tpu.memory_space<vmem>>, %arg5: memref<1x128xf32, #tpu.memory_space<vmem>>, %arg6: memref<128x128xf32, #tpu.memory_space<vmem>>, %arg7: memref<1x128xf32, #tpu.memory_space<vmem>>, %arg8: memref<8x128xf32, #tpu.memory_space<vmem>>, %arg9: memref<64x512xf32, #tpu.memory_space<vmem>>) attributes {dimension_semantics = [], scalar_prefetch = 0 : i64, scratch_operands = 1 : i64, tpu.core_type = #tpu.core_type<tc>} {
    %c0 = arith.constant 0 : index
    %c0_0 = arith.constant 0 : index
    %0 = vector.load %arg0[%c0, %c0_0] : memref<64x4xf32, #tpu.memory_space<vmem>>, vector<64x4xf32>
    %c0_1 = arith.constant 0 : index
    %c0_2 = arith.constant 0 : index
    %1 = vector.load %arg1[%c0_1, %c0_2] : memref<4x512xf32, #tpu.memory_space<vmem>>, vector<4x512xf32>
    %cst = arith.constant dense<0.000000e+00> : vector<64x512xf32>
    %2 = tpu.matmul %0, %1, %cst {dimension_numbers = #tpu.dot_dimension_numbers<[1], [0], [0], [1], [0, 0, 1, 1], [], []>} : vector<64x4xf32>, vector<4x512xf32>, vector<64x512xf32> -> vector<64x512xf32>
    %c0_3 = arith.constant 0 : index
    %c0_4 = arith.constant 0 : index
    %3 = vector.load %arg3[%c0_3, %c0_4] : memref<1x512xf32, #tpu.memory_space<vmem>>, vector<1x512xf32>
    %4 = vector.broadcast %3 : vector<1x512xf32> to vector<64x512xf32>
    %5 = arith.addf %2, %4 : vector<64x512xf32>
    %c0_5 = arith.constant 0 : index
    %c0_6 = arith.constant 0 : index
    %6 = vector.load %arg9[%c0_5, %c0_6] : memref<64x512xf32, #tpu.memory_space<vmem>>, vector<64x512xf32>
    tpu.vector_store %arg9[%c0_5, %c0_6], %5 {strides = array<i32>} : memref<64x512xf32, #tpu.memory_space<vmem>>, vector<64x512xf32>,
    %cst_7 = arith.constant 0.000000e+00 : f32
    %7 = vector.broadcast %cst_7 : f32 to vector<8x128xf32>
    %cst_8 = arith.constant 0.000000e+00 : f32
    %8 = vector.broadcast %cst_8 : f32 to vector<8x128xf32>
    %c0_9 = arith.constant 0 : index
    %c0_10 = arith.constant 0 : index
    %9 = vector.load %arg9[%c0_9, %c0_10] : memref<64x512xf32, #tpu.memory_space<vmem>>, vector<8x512xf32>
    %10 = arith.truncf %7 : vector<8x128xf32> to vector<8x128xbf16>
    %c0_11 = arith.constant 0 : index
    %c0_12 = arith.constant 0 : index
    %11 = vector.load %arg2[%c0_11, %c0_12] : memref<128x512xbf16, #tpu.memory_space<vmem>>, vector<128x512xbf16>
    %cst_13 = arith.constant dense<0.000000e+00> : vector<8x512xf32>
    %12 = tpu.matmul %10, %11, %cst_13 {dimension_numbers = #tpu.dot_dimension_numbers<[1], [0], [0], [1], [0, 0, 1, 1], [], []>} : vector<8x128xbf16>, vector<128x512xbf16>, vector<8x512xf32> -> vector<8x512xf32>
    %13 = arith.addf %9, %12 : vector<8x512xf32>
    %14 = vector.extract_strided_slice %13 {offsets = [0, 0], sizes = [8, 384], strides = [1, 1]} : vector<8x512xf32> to vector<8x384xf32>
    %15 = arith.negf %14 : vector<8x384xf32>
    %16 = math.exp %15 : vector<8x384xf32>
    %cst_14 = arith.constant 1.000000e+00 : f32
    %17 = vector.broadcast %cst_14 : f32 to vector<8x384xf32>
    %18 = arith.addf %17, %16 : vector<8x384xf32>
    %19 = arith.divf %17, %18 : vector<8x384xf32>
    %20 = vector.extract_strided_slice %13 {offsets = [0, 384], sizes = [8, 128], strides = [1, 1]} : vector<8x512xf32> to vector<8x128xf32>
    %21 = math.tanh %20 : vector<8x128xf32>
    %22 = vector.extract_strided_slice %19 {offsets = [0, 0], sizes = [8, 128], strides = [1, 1]} : vector<8x384xf32> to vector<8x128xf32>
    %23 = vector.extract_strided_slice %19 {offsets = [0, 128], sizes = [8, 128], strides = [1, 1]} : vector<8x384xf32> to vector<8x128xf32>
    %24 = vector.extract_strided_slice %19 {offsets = [0, 256], sizes = [8, 128], strides = [1, 1]} : vector<8x384xf32> to vector<8x128xf32>
    %25 = arith.mulf %23, %8 : vector<8x128xf32>
    %26 = arith.mulf %22, %21 : vector<8x128xf32>
    %27 = arith.addf %25, %26 : vector<8x128xf32>
    %28 = math.tanh %27 : vector<8x128xf32>
    %29 = arith.mulf %24, %28 : vector<8x128xf32>
    %c8 = arith.constant 8 : index
    %c0_15 = arith.constant 0 : index
    %30 = vector.load %arg9[%c8, %c0_15] : memref<64x512xf32, #tpu.memory_space<vmem>>, vector<8x512xf32>
    %31 = arith.truncf %29 : vector<8x128xf32> to vector<8x128xbf16>
    %c0_16 = arith.constant 0 : index
    %c0_17 = arith.constant 0 : index
    %32 = vector.load %arg2[%c0_16, %c0_17] : memref<128x512xbf16, #tpu.memory_space<vmem>>, vector<128x512xbf16>
    %cst_18 = arith.constant dense<0.000000e+00> : vector<8x512xf32>
    %33 = tpu.matmul %31, %32, %cst_18 {dimension_numbers = #tpu.dot_dimension_numbers<[1], [0], [0], [1], [0, 0, 1, 1], [], []>} : vector<8x128xbf16>, vector<128x512xbf16>, vector<8x512xf32> -> vector<8x512xf32>
    %34 = arith.addf %30, %33 : vector<8x512xf32>
    %35 = vector.extract_strided_slice %34 {offsets = [0, 0], sizes = [8, 384], strides = [1, 1]} : vector<8x512xf32> to vector<8x384xf32>
    %36 = arith.negf %35 : vector<8x384xf32>
    %37 = math.exp %36 : vector<8x384xf32>
    %cst_19 = arith.constant 1.000000e+00 : f32
    %38 = vector.broadcast %cst_19 : f32 to vector<8x384xf32>
    %39 = arith.addf %38, %37 : vector<8x384xf32>
    %40 = arith.divf %38, %39 : vector<8x384xf32>
    %41 = vector.extract_strided_slice %34 {offsets = [0, 384], sizes = [8, 128], strides = [1, 1]} : vector<8x512xf32> to vector<8x128xf32>
    %42 = math.tanh %41 : vector<8x128xf32>
    %43 = vector.extract_strided_slice %40 {offsets = [0, 0], sizes = [8, 128], strides = [1, 1]} : vector<8x384xf32> to vector<8x128xf32>
    %44 = vector.extract_strided_slice %40 {offsets = [0, 128], sizes = [8, 128], strides = [1, 1]} : vector<8x384xf32> to vector<8x128xf32>
    %45 = vector.extract_strided_slice %40 {offsets = [0, 256], sizes = [8, 128], strides = [1, 1]} : vector<8x384xf32> to vector<8x128xf32>
    %46 = arith.mulf %44, %27 : vector<8x128xf32>
    %47 = arith.mulf %43, %42 : vector<8x128xf32>
    %48 = arith.addf %46, %47 : vector<8x128xf32>
    %49 = math.tanh %48 : vector<8x128xf32>
    %50 = arith.mulf %45, %49 : vector<8x128xf32>
    %c16 = arith.constant 16 : index
    %c0_20 = arith.constant 0 : index
    %51 = vector.load %arg9[%c16, %c0_20] : memref<64x512xf32, #tpu.memory_space<vmem>>, vector<8x512xf32>
    %52 = arith.truncf %50 : vector<8x128xf32> to vector<8x128xbf16>
    %c0_21 = arith.constant 0 : index
    %c0_22 = arith.constant 0 : index
    %53 = vector.load %arg2[%c0_21, %c0_22] : memref<128x512xbf16, #tpu.memory_space<vmem>>, vector<128x512xbf16>
    %cst_23 = arith.constant dense<0.000000e+00> : vector<8x512xf32>
    %54 = tpu.matmul %52, %53, %cst_23 {dimension_numbers = #tpu.dot_dimension_numbers<[1], [0], [0], [1], [0, 0, 1, 1], [], []>} : vector<8x128xbf16>, vector<128x512xbf16>, vector<8x512xf32> -> vector<8x512xf32>
    %55 = arith.addf %51, %54 : vector<8x512xf32>
    %56 = vector.extract_strided_slice %55 {offsets = [0, 0], sizes = [8, 384], strides = [1, 1]} : vector<8x512xf32> to vector<8x384xf32>
    %57 = arith.negf %56 : vector<8x384xf32>
    %58 = math.exp %57 : vector<8x384xf32>
    %cst_24 = arith.constant 1.000000e+00 : f32
    %59 = vector.broadcast %cst_24 : f32 to vector<8x384xf32>
    %60 = arith.addf %59, %58 : vector<8x384xf32>
    %61 = arith.divf %59, %60 : vector<8x384xf32>
    %62 = vector.extract_strided_slice %55 {offsets = [0, 384], sizes = [8, 128], strides = [1, 1]} : vector<8x512xf32> to vector<8x128xf32>
    %63 = math.tanh %62 : vector<8x128xf32>
    %64 = vector.extract_strided_slice %61 {offsets = [0, 0], sizes = [8, 128], strides = [1, 1]} : vector<8x384xf32> to vector<8x128xf32>
    %65 = vector.extract_strided_slice %61 {offsets = [0, 128], sizes = [8, 128], strides = [1, 1]} : vector<8x384xf32> to vector<8x128xf32>
    %66 = vector.extract_strided_slice %61 {offsets = [0, 256], sizes = [8, 128], strides = [1, 1]} : vector<8x384xf32> to vector<8x128xf32>
    %67 = arith.mulf %65, %48 : vector<8x128xf32>
    %68 = arith.mulf %64, %63 : vector<8x128xf32>
    %69 = arith.addf %67, %68 : vector<8x128xf32>
    %70 = math.tanh %69 : vector<8x128xf32>
    %71 = arith.mulf %66, %70 : vector<8x128xf32>
    %c24 = arith.constant 24 : index
    %c0_25 = arith.constant 0 : index
    %72 = vector.load %arg9[%c24, %c0_25] : memref<64x512xf32, #tpu.memory_space<vmem>>, vector<8x512xf32>
    %73 = arith.truncf %71 : vector<8x128xf32> to vector<8x128xbf16>
    %c0_26 = arith.constant 0 : index
    %c0_27 = arith.constant 0 : index
    %74 = vector.load %arg2[%c0_26, %c0_27] : memref<128x512xbf16, #tpu.memory_space<vmem>>, vector<128x512xbf16>
    %cst_28 = arith.constant dense<0.000000e+00> : vector<8x512xf32>
    %75 = tpu.matmul %73, %74, %cst_28 {dimension_numbers = #tpu.dot_dimension_numbers<[1], [0], [0], [1], [0, 0, 1, 1], [], []>} : vector<8x128xbf16>, vector<128x512xbf16>, vector<8x512xf32> -> vector<8x512xf32>
    %76 = arith.addf %72, %75 : vector<8x512xf32>
    %77 = vector.extract_strided_slice %76 {offsets = [0, 0], sizes = [8, 384], strides = [1, 1]} : vector<8x512xf32> to vector<8x384xf32>
    %78 = arith.negf %77 : vector<8x384xf32>
    %79 = math.exp %78 : vector<8x384xf32>
    %cst_29 = arith.constant 1.000000e+00 : f32
    %80 = vector.broadcast %cst_29 : f32 to vector<8x384xf32>
    %81 = arith.addf %80, %79 : vector<8x384xf32>
    %82 = arith.divf %80, %81 : vector<8x384xf32>
    %83 = vector.extract_strided_slice %76 {offsets = [0, 384], sizes = [8, 128], strides = [1, 1]} : vector<8x512xf32> to vector<8x128xf32>
    %84 = math.tanh %83 : vector<8x128xf32>
    %85 = vector.extract_strided_slice %82 {offsets = [0, 0], sizes = [8, 128], strides = [1, 1]} : vector<8x384xf32> to vector<8x128xf32>
    %86 = vector.extract_strided_slice %82 {offsets = [0, 128], sizes = [8, 128], strides = [1, 1]} : vector<8x384xf32> to vector<8x128xf32>
    %87 = vector.extract_strided_slice %82 {offsets = [0, 256], sizes = [8, 128], strides = [1, 1]} : vector<8x384xf32> to vector<8x128xf32>
    %88 = arith.mulf %86, %69 : vector<8x128xf32>
    %89 = arith.mulf %85, %84 : vector<8x128xf32>
    %90 = arith.addf %88, %89 : vector<8x128xf32>
    %91 = math.tanh %90 : vector<8x128xf32>
    %92 = arith.mulf %87, %91 : vector<8x128xf32>
    %c32 = arith.constant 32 : index
    %c0_30 = arith.constant 0 : index
    %93 = vector.load %arg9[%c32, %c0_30] : memref<64x512xf32, #tpu.memory_space<vmem>>, vector<8x512xf32>
    %94 = arith.truncf %92 : vector<8x128xf32> to vector<8x128xbf16>
    %c0_31 = arith.constant 0 : index
    %c0_32 = arith.constant 0 : index
    %95 = vector.load %arg2[%c0_31, %c0_32] : memref<128x512xbf16, #tpu.memory_space<vmem>>, vector<128x512xbf16>
    %cst_33 = arith.constant dense<0.000000e+00> : vector<8x512xf32>
    %96 = tpu.matmul %94, %95, %cst_33 {dimension_numbers = #tpu.dot_dimension_numbers<[1], [0], [0], [1], [0, 0, 1, 1], [], []>} : vector<8x128xbf16>, vector<128x512xbf16>, vector<8x512xf32> -> vector<8x512xf32>
    %97 = arith.addf %93, %96 : vector<8x512xf32>
    %98 = vector.extract_strided_slice %97 {offsets = [0, 0], sizes = [8, 384], strides = [1, 1]} : vector<8x512xf32> to vector<8x384xf32>
    %99 = arith.negf %98 : vector<8x384xf32>
    %100 = math.exp %99 : vector<8x384xf32>
    %cst_34 = arith.constant 1.000000e+00 : f32
    %101 = vector.broadcast %cst_34 : f32 to vector<8x384xf32>
    %102 = arith.addf %101, %100 : vector<8x384xf32>
    %103 = arith.divf %101, %102 : vector<8x384xf32>
    %104 = vector.extract_strided_slice %97 {offsets = [0, 384], sizes = [8, 128], strides = [1, 1]} : vector<8x512xf32> to vector<8x128xf32>
    %105 = math.tanh %104 : vector<8x128xf32>
    %106 = vector.extract_strided_slice %103 {offsets = [0, 0], sizes = [8, 128], strides = [1, 1]} : vector<8x384xf32> to vector<8x128xf32>
    %107 = vector.extract_strided_slice %103 {offsets = [0, 128], sizes = [8, 128], strides = [1, 1]} : vector<8x384xf32> to vector<8x128xf32>
    %108 = vector.extract_strided_slice %103 {offsets = [0, 256], sizes = [8, 128], strides = [1, 1]} : vector<8x384xf32> to vector<8x128xf32>
    %109 = arith.mulf %107, %90 : vector<8x128xf32>
    %110 = arith.mulf %106, %105 : vector<8x128xf32>
    %111 = arith.addf %109, %110 : vector<8x128xf32>
    %112 = math.tanh %111 : vector<8x128xf32>
    %113 = arith.mulf %108, %112 : vector<8x128xf32>
    %c40 = arith.constant 40 : index
    %c0_35 = arith.constant 0 : index
    %114 = vector.load %arg9[%c40, %c0_35] : memref<64x512xf32, #tpu.memory_space<vmem>>, vector<8x512xf32>
    %115 = arith.truncf %113 : vector<8x128xf32> to vector<8x128xbf16>
    %c0_36 = arith.constant 0 : index
    %c0_37 = arith.constant 0 : index
    %116 = vector.load %arg2[%c0_36, %c0_37] : memref<128x512xbf16, #tpu.memory_space<vmem>>, vector<128x512xbf16>
    %cst_38 = arith.constant dense<0.000000e+00> : vector<8x512xf32>
    %117 = tpu.matmul %115, %116, %cst_38 {dimension_numbers = #tpu.dot_dimension_numbers<[1], [0], [0], [1], [0, 0, 1, 1], [], []>} : vector<8x128xbf16>, vector<128x512xbf16>, vector<8x512xf32> -> vector<8x512xf32>
    %118 = arith.addf %114, %117 : vector<8x512xf32>
    %119 = vector.extract_strided_slice %118 {offsets = [0, 0], sizes = [8, 384], strides = [1, 1]} : vector<8x512xf32> to vector<8x384xf32>
    %120 = arith.negf %119 : vector<8x384xf32>
    %121 = math.exp %120 : vector<8x384xf32>
    %cst_39 = arith.constant 1.000000e+00 : f32
    %122 = vector.broadcast %cst_39 : f32 to vector<8x384xf32>
    %123 = arith.addf %122, %121 : vector<8x384xf32>
    %124 = arith.divf %122, %123 : vector<8x384xf32>
    %125 = vector.extract_strided_slice %118 {offsets = [0, 384], sizes = [8, 128], strides = [1, 1]} : vector<8x512xf32> to vector<8x128xf32>
    %126 = math.tanh %125 : vector<8x128xf32>
    %127 = vector.extract_strided_slice %124 {offsets = [0, 0], sizes = [8, 128], strides = [1, 1]} : vector<8x384xf32> to vector<8x128xf32>
    %128 = vector.extract_strided_slice %124 {offsets = [0, 128], sizes = [8, 128], strides = [1, 1]} : vector<8x384xf32> to vector<8x128xf32>
    %129 = vector.extract_strided_slice %124 {offsets = [0, 256], sizes = [8, 128], strides = [1, 1]} : vector<8x384xf32> to vector<8x128xf32>
    %130 = arith.mulf %128, %111 : vector<8x128xf32>
    %131 = arith.mulf %127, %126 : vector<8x128xf32>
    %132 = arith.addf %130, %131 : vector<8x128xf32>
    %133 = math.tanh %132 : vector<8x128xf32>
    %134 = arith.mulf %129, %133 : vector<8x128xf32>
    %c48 = arith.constant 48 : index
    %c0_40 = arith.constant 0 : index
    %135 = vector.load %arg9[%c48, %c0_40] : memref<64x512xf32, #tpu.memory_space<vmem>>, vector<8x512xf32>
    %136 = arith.truncf %134 : vector<8x128xf32> to vector<8x128xbf16>
    %c0_41 = arith.constant 0 : index
    %c0_42 = arith.constant 0 : index
    %137 = vector.load %arg2[%c0_41, %c0_42] : memref<128x512xbf16, #tpu.memory_space<vmem>>, vector<128x512xbf16>
    %cst_43 = arith.constant dense<0.000000e+00> : vector<8x512xf32>
    %138 = tpu.matmul %136, %137, %cst_43 {dimension_numbers = #tpu.dot_dimension_numbers<[1], [0], [0], [1], [0, 0, 1, 1], [], []>} : vector<8x128xbf16>, vector<128x512xbf16>, vector<8x512xf32> -> vector<8x512xf32>
    %139 = arith.addf %135, %138 : vector<8x512xf32>
    %140 = vector.extract_strided_slice %139 {offsets = [0, 0], sizes = [8, 384], strides = [1, 1]} : vector<8x512xf32> to vector<8x384xf32>
    %141 = arith.negf %140 : vector<8x384xf32>
    %142 = math.exp %141 : vector<8x384xf32>
    %cst_44 = arith.constant 1.000000e+00 : f32
    %143 = vector.broadcast %cst_44 : f32 to vector<8x384xf32>
    %144 = arith.addf %143, %142 : vector<8x384xf32>
    %145 = arith.divf %143, %144 : vector<8x384xf32>
    %146 = vector.extract_strided_slice %139 {offsets = [0, 384], sizes = [8, 128], strides = [1, 1]} : vector<8x512xf32> to vector<8x128xf32>
    %147 = math.tanh %146 : vector<8x128xf32>
    %148 = vector.extract_strided_slice %145 {offsets = [0, 0], sizes = [8, 128], strides = [1, 1]} : vector<8x384xf32> to vector<8x128xf32>
    %149 = vector.extract_strided_slice %145 {offsets = [0, 128], sizes = [8, 128], strides = [1, 1]} : vector<8x384xf32> to vector<8x128xf32>
    %150 = vector.extract_strided_slice %145 {offsets = [0, 256], sizes = [8, 128], strides = [1, 1]} : vector<8x384xf32> to vector<8x128xf32>
    %151 = arith.mulf %149, %132 : vector<8x128xf32>
    %152 = arith.mulf %148, %147 : vector<8x128xf32>
    %153 = arith.addf %151, %152 : vector<8x128xf32>
    %154 = math.tanh %153 : vector<8x128xf32>
    %155 = arith.mulf %150, %154 : vector<8x128xf32>
    %c56 = arith.constant 56 : index
    %c0_45 = arith.constant 0 : index
    %156 = vector.load %arg9[%c56, %c0_45] : memref<64x512xf32, #tpu.memory_space<vmem>>, vector<8x512xf32>
    %157 = arith.truncf %155 : vector<8x128xf32> to vector<8x128xbf16>
    %c0_46 = arith.constant 0 : index
    %c0_47 = arith.constant 0 : index
    %158 = vector.load %arg2[%c0_46, %c0_47] : memref<128x512xbf16, #tpu.memory_space<vmem>>, vector<128x512xbf16>
    %cst_48 = arith.constant dense<0.000000e+00> : vector<8x512xf32>
    %159 = tpu.matmul %157, %158, %cst_48 {dimension_numbers = #tpu.dot_dimension_numbers<[1], [0], [0], [1], [0, 0, 1, 1], [], []>} : vector<8x128xbf16>, vector<128x512xbf16>, vector<8x512xf32> -> vector<8x512xf32>
    %160 = arith.addf %156, %159 : vector<8x512xf32>
    %161 = vector.extract_strided_slice %160 {offsets = [0, 0], sizes = [8, 384], strides = [1, 1]} : vector<8x512xf32> to vector<8x384xf32>
    %162 = arith.negf %161 : vector<8x384xf32>
    %163 = math.exp %162 : vector<8x384xf32>
    %cst_49 = arith.constant 1.000000e+00 : f32
    %164 = vector.broadcast %cst_49 : f32 to vector<8x384xf32>
    %165 = arith.addf %164, %163 : vector<8x384xf32>
    %166 = arith.divf %164, %165 : vector<8x384xf32>
    %167 = vector.extract_strided_slice %160 {offsets = [0, 384], sizes = [8, 128], strides = [1, 1]} : vector<8x512xf32> to vector<8x128xf32>
    %168 = math.tanh %167 : vector<8x128xf32>
    %169 = vector.extract_strided_slice %166 {offsets = [0, 0], sizes = [8, 128], strides = [1, 1]} : vector<8x384xf32> to vector<8x128xf32>
    %170 = vector.extract_strided_slice %166 {offsets = [0, 128], sizes = [8, 128], strides = [1, 1]} : vector<8x384xf32> to vector<8x128xf32>
    %171 = vector.extract_strided_slice %166 {offsets = [0, 256], sizes = [8, 128], strides = [1, 1]} : vector<8x384xf32> to vector<8x128xf32>
    %172 = arith.mulf %170, %153 : vector<8x128xf32>
    %173 = arith.mulf %169, %168 : vector<8x128xf32>
    %174 = arith.addf %172, %173 : vector<8x128xf32>
    %175 = math.tanh %174 : vector<8x128xf32>
    %176 = arith.mulf %171, %175 : vector<8x128xf32>
    %cst_50 = arith.constant 0.000000e+00 : f32
    %177 = vector.broadcast %cst_50 : f32 to vector<8x128xf32>
    %178 = arith.maximumf %176, %177 : vector<8x128xf32>
    %c0_51 = arith.constant 0 : index
    %c0_52 = arith.constant 0 : index
    %179 = vector.load %arg4[%c0_51, %c0_52] : memref<128x128xf32, #tpu.memory_space<vmem>>, vector<128x128xf32>
    %cst_53 = arith.constant dense<0.000000e+00> : vector<8x128xf32>
    %180 = tpu.matmul %178, %179, %cst_53 {dimension_numbers = #tpu.dot_dimension_numbers<[1], [0], [0], [1], [0, 0, 1, 1], [], []>} : vector<8x128xf32>, vector<128x128xf32>, vector<8x128xf32> -> vector<8x128xf32>
    %c0_54 = arith.constant 0 : index
    %c0_55 = arith.constant 0 : index
    %181 = vector.load %arg5[%c0_54, %c0_55] : memref<1x128xf32, #tpu.memory_space<vmem>>, vector<1x128xf32>
    %182 = vector.broadcast %181 : vector<1x128xf32> to vector<8x128xf32>
    %183 = arith.addf %180, %182 : vector<8x128xf32>
    %cst_56 = arith.constant 0.000000e+00 : f32
    %184 = vector.broadcast %cst_56 : f32 to vector<8x128xf32>
    %185 = arith.maximumf %183, %184 : vector<8x128xf32>
    %c0_57 = arith.constant 0 : index
    %c0_58 = arith.constant 0 : index
    %186 = vector.load %arg6[%c0_57, %c0_58] : memref<128x128xf32, #tpu.memory_space<vmem>>, vector<128x128xf32>
    %cst_59 = arith.constant dense<0.000000e+00> : vector<8x128xf32>
    %187 = tpu.matmul %185, %186, %cst_59 {dimension_numbers = #tpu.dot_dimension_numbers<[1], [0], [0], [1], [0, 0, 1, 1], [], []>} : vector<8x128xf32>, vector<128x128xf32>, vector<8x128xf32> -> vector<8x128xf32>
    %c0_60 = arith.constant 0 : index
    %c0_61 = arith.constant 0 : index
    %188 = vector.load %arg7[%c0_60, %c0_61] : memref<1x128xf32, #tpu.memory_space<vmem>>, vector<1x128xf32>
    %189 = vector.broadcast %188 : vector<1x128xf32> to vector<8x128xf32>
    %190 = arith.addf %187, %189 : vector<8x128xf32>
    %c0_62 = arith.constant 0 : index
    %c0_63 = arith.constant 0 : index
    %191 = vector.load %arg8[%c0_62, %c0_63] : memref<8x128xf32, #tpu.memory_space<vmem>>, vector<8x128xf32>
    tpu.vector_store %arg8[%c0_62, %c0_63], %190 {strides = array<i32>} : memref<8x128xf32, #tpu.memory_space<vmem>>, vector<8x128xf32>,
    return
  }
}

</mosaic_0001>

<llo_original>
// kernel: lstm_forward.1
$region0: #{lstm_forward.1}
  #allocation0 [shape = 'u32[]', space=smem, size = 0x4, offset = 0x4, fixed_abs, tag = 'smem constant byte address 0x4 - core index']
  #allocation1 [shape = 'u32[144,128]{1,0:T(1,128)}', space=vmem, size = 0x12000, scoped, tag = 'internal scratch']
  #allocation2 [shape = 'f32[64,512]{1,0:T(8,128)}', space=vmem, size = 0x20000, scoped, tag = 'scratch operand']
  %s0 = inlined_call_operand.vmem [shape: f32[64,4], index: 0, kind: input, shape index: {}]
  %s1 = inlined_call_operand.vmem [shape: f32[4,512], index: 1, kind: input, shape index: {}]
  %s2 = inlined_call_operand.vmem [shape: bf16[128,512], index: 2, kind: input, shape index: {}]
  %s3 = inlined_call_operand.vmem [shape: f32[1,512], index: 3, kind: input, shape index: {}]
  %s4 = inlined_call_operand.vmem [shape: f32[128,128], index: 4, kind: input, shape index: {}]
  %s5 = inlined_call_operand.vmem [shape: f32[1,128], index: 5, kind: input, shape index: {}]
  %s6 = inlined_call_operand.vmem [shape: f32[128,128], index: 6, kind: input, shape index: {}]
  %s7 = inlined_call_operand.vmem [shape: f32[1,128], index: 7, kind: input, shape index: {}]
  %s8 = inlined_call_operand.vmem [shape: f32[8,128], index: 8, kind: output, shape index: {}]
  %s9 = sld [smem:[#allocation0]]
  $region42: #{lstm_forward.1} parent=0
    _
  %s11 = ssub.s32 1, %s9
  %s12 = scalar_select 0, %s11, %s9
  // Predicated region
  $region2: #{lstm_forward.1} parent=0 // pred_check
    _
  $region3: #{lstm_forward.1} parent=0 // pred_check_branch
    %14 = sbr.rel (0) target = $region5
  $region4: #{lstm_forward.1} parent=0 // pred_region
    _
  $region5: #{lstm_forward.1} parent=0 // pred_fallthru
    _
  // Predicated region
  $region6: #{lstm_forward.1} parent=0 // pred_check
    _
  $region7: #{lstm_forward.1} parent=0 // pred_check_branch
    %16 = sbr.rel (0) target = $region9
  $region8: #{lstm_forward.1} parent=0 // pred_region
    _
  $region9: #{lstm_forward.1} parent=0 // pred_fallthru
    _
  // Predicated region
  $region10: #{lstm_forward.1} parent=0 // pred_check
    _
  $region11: #{lstm_forward.1} parent=0 // pred_check_branch
    %18 = sbr.rel (0) target = $region13
  $region12: #{lstm_forward.1} parent=0 // pred_region
    _
  $region13: #{lstm_forward.1} parent=0 // pred_fallthru
    _
  // Predicated region
  $region14: #{lstm_forward.1} parent=0 // pred_check
    _
  $region15: #{lstm_forward.1} parent=0 // pred_check_branch
    %20 = sbr.rel (0) target = $region17
  $region16: #{lstm_forward.1} parent=0 // pred_region
    _
  $region17: #{lstm_forward.1} parent=0 // pred_fallthru
    _
  // Predicated region
  $region18: #{lstm_forward.1} parent=0 // pred_check
    _
  $region19: #{lstm_forward.1} parent=0 // pred_check_branch
    %22 = sbr.rel (0) target = $region21
  $region20: #{lstm_forward.1} parent=0 // pred_region
    _
  $region21: #{lstm_forward.1} parent=0 // pred_fallthru
    _
  // Predicated region
  $region22: #{lstm_forward.1} parent=0 // pred_check
    _
  $region23: #{lstm_forward.1} parent=0 // pred_check_branch
    %24 = sbr.rel (0) target = $region25
  $region24: #{lstm_forward.1} parent=0 // pred_region
    _
  $region25: #{lstm_forward.1} parent=0 // pred_fallthru
    _
  // Predicated region
  $region26: #{lstm_forward.1} parent=0 // pred_check
    _
  $region27: #{lstm_forward.1} parent=0 // pred_check_branch
    %26 = sbr.rel (0) target = $region29
  $region28: #{lstm_forward.1} parent=0 // pred_region
    _
  $region29: #{lstm_forward.1} parent=0 // pred_fallthru
    _
  // Predicated region
  $region30: #{lstm_forward.1} parent=0 // pred_check
    _
  $region31: #{lstm_forward.1} parent=0 // pred_check_branch
    %28 = sbr.rel (0) target = $region33
  $region32: #{lstm_forward.1} parent=0 // pred_region
    _
  $region33: #{lstm_forward.1} parent=0 // pred_fallthru
    _
  %v30 = vld [vmem:[%s0] sm:$0xff]
  %v31 = vld [vmem:[%s0 + $0x8] sm:$0xff]
  %v32 = vld [vmem:[%s0 + $0x10] sm:$0xff]
  %v33 = vld [vmem:[%s0 + $0x18] sm:$0xff]
  %v34 = vld [vmem:[%s0 + $0x20] sm:$0xff]
  %v35 = vld [vmem:[%s0 + $0x28] sm:$0xff]
  %v36 = vld [vmem:[%s0 + $0x30] sm:$0xff]
  %v37 = vld [vmem:[%s0 + $0x38] sm:$0xff]
  %v38 = vld [vmem:[%s1] sm:$0xff]
  %v39 = vld [vmem:[%s1 + $0x8] sm:$0xff]
  %v40 = vld [vmem:[%s3] sm:$0xf]
  %v42 = vlaneseq
  %v43 = vshrl.u32 %v42, 7
  %v44 = vsub.s32 0, %v43
  %v45 = vrot.slane %v40, %v44
  %v46 = vlaneseq
  %v47 = vshrl.u32 %v46, 7
  %v48 = vsub.s32 1, %v47
  %v49 = vrot.slane %v40, %v48
  %v50 = vlaneseq
  %v51 = vshrl.u32 %v50, 7
  %v52 = vsub.s32 2, %v51
  %v53 = vrot.slane %v40, %v52
  %v54 = vlaneseq
  %v55 = vshrl.u32 %v54, 7
  %v56 = vsub.s32 3, %v55
  %v57 = vrot.slane %v40, %v56
  %v64 = vcombine.high %v38, %v38
  %v65 = vcombine.high %v39, %v39
  %vm66 = vcmask 31744
  %v68 = vsel %vm66, %v30, 0
  %v71 = vsel %vm66, %v31, 0
  %v74 = vsel %vm66, %v32, 0
  %v77 = vsel %vm66, %v33, 0
  %v80 = vsel %vm66, %v34, 0
  %v83 = vsel %vm66, %v35, 0
  %v86 = vsel %vm66, %v36, 0
  %v89 = vsel %vm66, %v37, 0
  %vm91 = vcmask 1043456
  %v92 = vsel %vm91, %v38, 0
  %v94 = vsel %vm91, %v64, 0
  %v96 = vsel %vm91, %v39, 0
  %v98 = vsel %vm91, %v65, 0
  %100 = vmatprep.subr.mxu0 0.0
  %101 = vmatpush1.msra.mxu0 0.0
  %102 = vmatprep.subr.mxu0 0.0
  %103 = vmatpush1.msra.mxu0 0.0
  %104 = vmatprep.subr.mxu0 0.0
  %105 = vmatpush1.msra.mxu0 0.0
  %106 = vmatprep.subr.mxu0 0.0
  %107 = vmatpush1.msra.mxu0 0.0
  %108 = vmatprep.subr.mxu0 0.0
  %109 = vmatpush1.msra.mxu0 0.0
  %110 = vmatprep.subr.mxu0 0.0
  %111 = vmatpush1.msra.mxu0 0.0
  %112 = vmatprep.subr.mxu0 0.0
  %113 = vmatpush1.msra.mxu0 0.0
  %114 = vmatprep.subr.mxu0 0.0
  %115 = vmatpush1.msra.mxu0 0.0
  %116 = vmatprep.subr.mxu0 0.0
  %117 = vmatpush1.msra.mxu0 0.0
  %118 = vmatprep.subr.mxu0 0.0
  %119 = vmatpush1.msra.mxu0 0.0
  %120 = vmatprep.subr.mxu0 0.0
  %121 = vmatpush1.msra.mxu0 0.0
  %122 = vmatprep.subr.mxu0 0.0
  %123 = vmatpush1.msra.mxu0 0.0
  %124 = vmatprep.subr.mxu0 0.0
  %125 = vmatpush1.msra.mxu0 0.0
  %126 = vmatprep.subr.mxu0 0.0
  %127 = vmatpush1.msra.mxu0 0.0
  %128 = vmatprep.subr.mxu0 0.0
  %129 = vmatpush1.msra.mxu0 0.0
  %130 = vmatprep.subr.mxu0 %v94
  %131 = vmatpush1.msra.mxu0 %v92
  %132 = vmatprep.subr.mxu0 0.0
  %133 = vmatpush2.msra.mxu0 0.0
  %134 = vmatprep.subr.mxu0 0.0
  %135 = vmatpush2.msra.mxu0 0.0
  %136 = vmatprep.subr.mxu0 0.0
  %137 = vmatpush2.msra.mxu0 0.0
  %138 = vmatprep.subr.mxu0 0.0
  %139 = vmatpush2.msra.mxu0 0.0
  %140 = vmatprep.subr.mxu0 0.0
  %141 = vmatpush2.msra.mxu0 0.0
  %142 = vmatprep.subr.mxu0 0.0
  %143 = vmatpush2.msra.mxu0 0.0
  %144 = vmatprep.subr.mxu0 0.0
  %145 = vmatpush2.msra.mxu0 0.0
  %146 = vmatprep.subr.mxu0 0.0
  %147 = vmatpush2.msra.mxu0 0.0
  %148 = vmatprep.subr.mxu0 0.0
  %149 = vmatpush2.msra.mxu0 0.0
  %150 = vmatprep.subr.mxu0 0.0
  %151 = vmatpush2.msra.mxu0 0.0
  %152 = vmatprep.subr.mxu0 0.0
  %153 = vmatpush2.msra.mxu0 0.0
  %154 = vmatprep.subr.mxu0 0.0
  %155 = vmatpush2.msra.mxu0 0.0
  %156 = vmatprep.subr.mxu0 0.0
  %157 = vmatpush2.msra.mxu0 0.0
  %158 = vmatprep.subr.mxu0 0.0
  %159 = vmatpush2.msra.mxu0 0.0
  %160 = vmatprep.subr.mxu0 0.0
  %161 = vmatpush2.msra.mxu0 0.0
  %162 = vmatprep.subr.mxu0 0.0
  %163 = vmatpush2.msra.mxu0 0.0
  %164 = vmatprep.mubr.f32.mxu0 0.0
  %165 = vmatmul.mubr.f32.gmra.mxu0 %v68
  %v166 = vpop.f32.mrf.mxu0
  %v167 = vadd.f32 %v45, %v166
  %v168 = vpop.f32.mrf.mxu0
  %v169 = vadd.f32 %v49, %v168
  %170 = vmatprep.mubr.f32.mxu0 0.0
  %171 = vmatmul.mubr.f32.gmra.mxu0 %v71
  %v172 = vpop.f32.mrf.mxu0
  %v173 = vadd.f32 %v45, %v172
  %v174 = vpop.f32.mrf.mxu0
  %v175 = vadd.f32 %v49, %v174
  %176 = vmatprep.mubr.f32.mxu0 0.0
  %177 = vmatmul.mubr.f32.gmra.mxu0 %v74
  %v178 = vpop.f32.mrf.mxu0
  %v179 = vadd.f32 %v45, %v178
  %v180 = vpop.f32.mrf.mxu0
  %v181 = vadd.f32 %v49, %v180
  %182 = vmatprep.mubr.f32.mxu0 0.0
  %183 = vmatmul.mubr.f32.gmra.mxu0 %v77
  %v184 = vpop.f32.mrf.mxu0
  %v185 = vadd.f32 %v45, %v184
  %v186 = vpop.f32.mrf.mxu0
  %v187 = vadd.f32 %v49, %v186
  %188 = vmatprep.mubr.f32.mxu0 0.0
  %189 = vmatmul.mubr.f32.gmra.mxu0 %v80
  %v190 = vpop.f32.mrf.mxu0
  %v191 = vadd.f32 %v45, %v190
  %v192 = vpop.f32.mrf.mxu0
  %v193 = vadd.f32 %v49, %v192
  %194 = vmatprep.mubr.f32.mxu0 0.0
  %195 = vmatmul.mubr.f32.gmra.mxu0 %v83
  %v196 = vpop.f32.mrf.mxu0
  %v197 = vadd.f32 %v45, %v196
  %v198 = vpop.f32.mrf.mxu0
  %v199 = vadd.f32 %v49, %v198
  %200 = vmatprep.mubr.f32.mxu0 0.0
  %201 = vmatmul.mubr.f32.gmra.mxu0 %v86
  %v202 = vpop.f32.mrf.mxu0
  %v203 = vadd.f32 %v45, %v202
  %v204 = vpop.f32.mrf.mxu0
  %v205 = vadd.f32 %v49, %v204
  %206 = vmatprep.mubr.f32.mxu0 0.0
  %207 = vmatmul.mubr.f32.gmra.mxu0 %v89
  %v208 = vpop.f32.mrf.mxu0
  %v209 = vadd.f32 %v45, %v208
  %v210 = vpop.f32.mrf.mxu0
  %v211 = vadd.f32 %v49, %v210
  %212 = vdwg.mxu0
  %213 = vmatprep.subr.mxu0 0.0
  %214 = vmatpush1.msra.mxu0 0.0
  %215 = vmatprep.subr.mxu0 0.0
  %216 = vmatpush1.msra.mxu0 0.0
  %217 = vmatprep.subr.mxu0 0.0
  %218 = vmatpush1.msra.mxu0 0.0
  %219 = vmatprep.subr.mxu0 0.0
  %220 = vmatpush1.msra.mxu0 0.0
  %221 = vmatprep.subr.mxu0 0.0
  %222 = vmatpush1.msra.mxu0 0.0
  %223 = vmatprep.subr.mxu0 0.0
  %224 = vmatpush1.msra.mxu0 0.0
  %225 = vmatprep.subr.mxu0 0.0
  %226 = vmatpush1.msra.mxu0 0.0
  %227 = vmatprep.subr.mxu0 0.0
  %228 = vmatpush1.msra.mxu0 0.0
  %229 = vmatprep.subr.mxu0 0.0
  %230 = vmatpush1.msra.mxu0 0.0
  %231 = vmatprep.subr.mxu0 0.0
  %232 = vmatpush1.msra.mxu0 0.0
  %233 = vmatprep.subr.mxu0 0.0
  %234 = vmatpush1.msra.mxu0 0.0
  %235 = vmatprep.subr.mxu0 0.0
  %236 = vmatpush1.msra.mxu0 0.0
  %237 = vmatprep.subr.mxu0 0.0
  %238 = vmatpush1.msra.mxu0 0.0
  %239 = vmatprep.subr.mxu0 0.0
  %240 = vmatpush1.msra.mxu0 0.0
  %241 = vmatprep.subr.mxu0 0.0
  %242 = vmatpush1.msra.mxu0 0.0
  %243 = vmatprep.subr.mxu0 %v98
  %244 = vmatpush1.msra.mxu0 %v96
  %245 = vmatprep.subr.mxu0 0.0
  %246 = vmatpush2.msra.mxu0 0.0
  %247 = vmatprep.subr.mxu0 0.0
  %248 = vmatpush2.msra.mxu0 0.0
  %249 = vmatprep.subr.mxu0 0.0
  %250 = vmatpush2.msra.mxu0 0.0
  %251 = vmatprep.subr.mxu0 0.0
  %252 = vmatpush2.msra.mxu0 0.0
  %253 = vmatprep.subr.mxu0 0.0
  %254 = vmatpush2.msra.mxu0 0.0
  %255 = vmatprep.subr.mxu0 0.0
  %256 = vmatpush2.msra.mxu0 0.0
  %257 = vmatprep.subr.mxu0 0.0
  %258 = vmatpush2.msra.mxu0 0.0
  %259 = vmatprep.subr.mxu0 0.0
  %260 = vmatpush2.msra.mxu0 0.0
  %261 = vmatprep.subr.mxu0 0.0
  %262 = vmatpush2.msra.mxu0 0.0
  %263 = vmatprep.subr.mxu0 0.0
  %264 = vmatpush2.msra.mxu0 0.0
  %265 = vmatprep.subr.mxu0 0.0
  %266 = vmatpush2.msra.mxu0 0.0
  %267 = vmatprep.subr.mxu0 0.0
  %268 = vmatpush2.msra.mxu0 0.0
  %269 = vmatprep.subr.mxu0 0.0
  %270 = vmatpush2.msra.mxu0 0.0
  %271 = vmatprep.subr.mxu0 0.0
  %272 = vmatpush2.msra.mxu0 0.0
  %273 = vmatprep.subr.mxu0 0.0
  %274 = vmatpush2.msra.mxu0 0.0
  %275 = vmatprep.subr.mxu0 0.0
  %276 = vmatpush2.msra.mxu0 0.0
  %277 = vmatprep.mubr.f32.mxu0 0.0
  %278 = vmatmul.mubr.f32.gmra.mxu0 %v68
  %v279 = vpop.f32.mrf.mxu0
  %v280 = vadd.f32 %v53, %v279
  %v281 = vpop.f32.mrf.mxu0
  %v282 = vadd.f32 %v57, %v281
  %283 = vmatprep.mubr.f32.mxu0 0.0
  %284 = vmatmul.mubr.f32.gmra.mxu0 %v71
  %v285 = vpop.f32.mrf.mxu0
  %v286 = vadd.f32 %v53, %v285
  %v287 = vpop.f32.mrf.mxu0
  %v288 = vadd.f32 %v57, %v287
  %289 = vmatprep.mubr.f32.mxu0 0.0
  %290 = vmatmul.mubr.f32.gmra.mxu0 %v74
  %v291 = vpop.f32.mrf.mxu0
  %v292 = vadd.f32 %v53, %v291
  %v293 = vpop.f32.mrf.mxu0
  %v294 = vadd.f32 %v57, %v293
  %295 = vmatprep.mubr.f32.mxu0 0.0
  %296 = vmatmul.mubr.f32.gmra.mxu0 %v77
  %v297 = vpop.f32.mrf.mxu0
  %v298 = vadd.f32 %v53, %v297
  %v299 = vpop.f32.mrf.mxu0
  %v300 = vadd.f32 %v57, %v299
  %301 = vmatprep.mubr.f32.mxu0 0.0
  %302 = vmatmul.mubr.f32.gmra.mxu0 %v80
  %v303 = vpop.f32.mrf.mxu0
  %v304 = vadd.f32 %v53, %v303
  %v305 = vpop.f32.mrf.mxu0
  %v306 = vadd.f32 %v57, %v305
  %307 = vmatprep.mubr.f32.mxu0 0.0
  %308 = vmatmul.mubr.f32.gmra.mxu0 %v83
  %v309 = vpop.f32.mrf.mxu0
  %v310 = vadd.f32 %v53, %v309
  %v311 = vpop.f32.mrf.mxu0
  %v312 = vadd.f32 %v57, %v311
  %313 = vmatprep.mubr.f32.mxu0 0.0
  %314 = vmatmul.mubr.f32.gmra.mxu0 %v86
  %v315 = vpop.f32.mrf.mxu0
  %v316 = vadd.f32 %v53, %v315
  %v317 = vpop.f32.mrf.mxu0
  %v318 = vadd.f32 %v57, %v317
  %319 = vmatprep.mubr.f32.mxu0 0.0
  %320 = vmatmul.mubr.f32.gmra.mxu0 %v89
  %v321 = vpop.f32.mrf.mxu0
  %v322 = vadd.f32 %v53, %v321
  %v323 = vpop.f32.mrf.mxu0
  %v324 = vadd.f32 %v57, %v323
  %325 = vdwg.mxu0
  %326 = vst [vmem:[#allocation2] sm:$0xff] %v167
  %327 = vst [vmem:[#allocation2 + $0x8] sm:$0xff] %v169
  %328 = vst [vmem:[#allocation2 + $0x10] sm:$0xff] %v280
  %329 = vst [vmem:[#allocation2 + $0x18] sm:$0xff] %v282
  %330 = vst [vmem:[#allocation2 + $0x20] sm:$0xff] %v173
  %331 = vst [vmem:[#allocation2 + $0x28] sm:$0xff] %v175
  %332 = vst [vmem:[#allocation2 + $0x30] sm:$0xff] %v286
  %333 = vst [vmem:[#allocation2 + $0x38] sm:$0xff] %v288
  %334 = vst [vmem:[#allocation2 + $0x40] sm:$0xff] %v179
  %335 = vst [vmem:[#allocation2 + $0x48] sm:$0xff] %v181
  %336 = vst [vmem:[#allocation2 + $0x50] sm:$0xff] %v292
  %337 = vst [vmem:[#allocation2 + $0x58] sm:$0xff] %v294
  %338 = vst [vmem:[#allocation2 + $0x60] sm:$0xff] %v185
  %339 = vst [vmem:[#allocation2 + $0x68] sm:$0xff] %v187
  %340 = vst [vmem:[#allocation2 + $0x70] sm:$0xff] %v298
  %341 = vst [vmem:[#allocation2 + $0x78] sm:$0xff] %v300
  %342 = vst [vmem:[#allocation2 + $0x80] sm:$0xff] %v191
  %343 = vst [vmem:[#allocation2 + $0x88] sm:$0xff] %v193
  %344 = vst [vmem:[#allocation2 + $0x90] sm:$0xff] %v304
  %345 = vst [vmem:[#allocation2 + $0x98] sm:$0xff] %v306
  %346 = vst [vmem:[#allocation2 + $0xa0] sm:$0xff] %v197
  %347 = vst [vmem:[#allocation2 + $0xa8] sm:$0xff] %v199
  %348 = vst [vmem:[#allocation2 + $0xb0] sm:$0xff] %v310
  %349 = vst [vmem:[#allocation2 + $0xb8] sm:$0xff] %v312
  %350 = vst [vmem:[#allocation2 + $0xc0] sm:$0xff] %v203
  %351 = vst [vmem:[#allocation2 + $0xc8] sm:$0xff] %v205
  %352 = vst [vmem:[#allocation2 + $0xd0] sm:$0xff] %v316
  %353 = vst [vmem:[#allocation2 + $0xd8] sm:$0xff] %v318
  %354 = vst [vmem:[#allocation2 + $0xe0] sm:$0xff] %v209
  %355 = vst [vmem:[#allocation2 + $0xe8] sm:$0xff] %v211
  %356 = vst [vmem:[#allocation2 + $0xf0] sm:$0xff] %v322
  %357 = vst [vmem:[#allocation2 + $0xf8] sm:$0xff] %v324
  %v358 = vld [vmem:[#allocation2] sm:$0xff]
  %v359 = vld [vmem:[#allocation2 + $0x8] sm:$0xff]
  %v360 = vld [vmem:[#allocation2 + $0x10] sm:$0xff]
  %v361 = vld [vmem:[#allocation2 + $0x18] sm:$0xff]
  %v362 = vld [vmem:[%s2] sm:$0xff]
  %v363 = vld [vmem:[%s2 + $0x8] sm:$0xff]
  %v364 = vld [vmem:[%s2 + $0x10] sm:$0xff]
  %v365 = vld [vmem:[%s2 + $0x18] sm:$0xff]
  %v366 = vld [vmem:[%s2 + $0x20] sm:$0xff]
  %v367 = vld [vmem:[%s2 + $0x28] sm:$0xff]
  %v368 = vld [vmem:[%s2 + $0x30] sm:$0xff]
  %v369 = vld [vmem:[%s2 + $0x38] sm:$0xff]
  %v370 = vld [vmem:[%s2 + $0x40] sm:$0xff]
  %v371 = vld [vmem:[%s2 + $0x48] sm:$0xff]
  %v372 = vld [vmem:[%s2 + $0x50] sm:$0xff]
  %v373 = vld [vmem:[%s2 + $0x58] sm:$0xff]
  %v374 = vld [vmem:[%s2 + $0x60] sm:$0xff]
  %v375 = vld [vmem:[%s2 + $0x68] sm:$0xff]
  %v376 = vld [vmem:[%s2 + $0x70] sm:$0xff]
  %v377 = vld [vmem:[%s2 + $0x78] sm:$0xff]
  %v378 = vld [vmem:[%s2 + $0x80] sm:$0xff]
  %v379 = vld [vmem:[%s2 + $0x88] sm:$0xff]
  %v380 = vld [vmem:[%s2 + $0x90] sm:$0xff]
  %v381 = vld [vmem:[%s2 + $0x98] sm:$0xff]
  %v382 = vld [vmem:[%s2 + $0xa0] sm:$0xff]
  %v383 = vld [vmem:[%s2 + $0xa8] sm:$0xff]
  %v384 = vld [vmem:[%s2 + $0xb0] sm:$0xff]
  %v385 = vld [vmem:[%s2 + $0xb8] sm:$0xff]
  %v386 = vld [vmem:[%s2 + $0xc0] sm:$0xff]
  %v387 = vld [vmem:[%s2 + $0xc8] sm:$0xff]
  %v388 = vld [vmem:[%s2 + $0xd0] sm:$0xff]
  %v389 = vld [vmem:[%s2 + $0xd8] sm:$0xff]
  %v390 = vld [vmem:[%s2 + $0xe0] sm:$0xff]
  %v391 = vld [vmem:[%s2 + $0xe8] sm:$0xff]
  %v392 = vld [vmem:[%s2 + $0xf0] sm:$0xff]
  %v393 = vld [vmem:[%s2 + $0xf8] sm:$0xff]
  %v426 = vunpack.c.l.b16 %v362
  %v427 = vunpack.c.h.b16 %v362
  %v428 = vunpack.c.l.b16 %v363
  %v429 = vunpack.c.h.b16 %v363
  %v430 = vunpack.c.l.b16 %v364
  %v431 = vunpack.c.h.b16 %v364
  %v432 = vunpack.c.l.b16 %v365
  %v433 = vunpack.c.h.b16 %v365
  %v434 = vunpack.c.l.b16 %v366
  %v435 = vunpack.c.h.b16 %v366
  %v436 = vunpack.c.l.b16 %v367
  %v437 = vunpack.c.h.b16 %v367
  %v438 = vunpack.c.l.b16 %v368
  %v439 = vunpack.c.h.b16 %v368
  %v440 = vunpack.c.l.b16 %v369
  %v441 = vunpack.c.h.b16 %v369
  %v442 = vunpack.c.l.b16 %v370
  %v443 = vunpack.c.h.b16 %v370
  %v444 = vunpack.c.l.b16 %v371
  %v445 = vunpack.c.h.b16 %v371
  %v446 = vunpack.c.l.b16 %v372
  %v447 = vunpack.c.h.b16 %v372
  %v448 = vunpack.c.l.b16 %v373
  %v449 = vunpack.c.h.b16 %v373
  %v450 = vunpack.c.l.b16 %v374
  %v451 = vunpack.c.h.b16 %v374
  %v452 = vunpack.c.l.b16 %v375
  %v453 = vunpack.c.h.b16 %v375
  %v454 = vunpack.c.l.b16 %v376
  %v455 = vunpack.c.h.b16 %v376
  %v456 = vunpack.c.l.b16 %v377
  %v457 = vunpack.c.h.b16 %v377
  %v458 = vunpack.c.l.b16 %v378
  %v459 = vunpack.c.h.b16 %v378
  %v460 = vunpack.c.l.b16 %v379
  %v461 = vunpack.c.h.b16 %v379
  %v462 = vunpack.c.l.b16 %v380
  %v463 = vunpack.c.h.b16 %v380
  %v464 = vunpack.c.l.b16 %v381
  %v465 = vunpack.c.h.b16 %v381
  %v466 = vunpack.c.l.b16 %v382
  %v467 = vunpack.c.h.b16 %v382
  %v468 = vunpack.c.l.b16 %v383
  %v469 = vunpack.c.h.b16 %v383
  %v470 = vunpack.c.l.b16 %v384
  %v471 = vunpack.c.h.b16 %v384
  %v472 = vunpack.c.l.b16 %v385
  %v473 = vunpack.c.h.b16 %v385
  %v474 = vunpack.c.l.b16 %v386
  %v475 = vunpack.c.h.b16 %v386
  %v476 = vunpack.c.l.b16 %v387
  %v477 = vunpack.c.h.b16 %v387
  %v478 = vunpack.c.l.b16 %v388
  %v479 = vunpack.c.h.b16 %v388
  %v480 = vunpack.c.l.b16 %v389
  %v481 = vunpack.c.h.b16 %v389
  %v482 = vunpack.c.l.b16 %v390
  %v483 = vunpack.c.h.b16 %v390
  %v484 = vunpack.c.l.b16 %v391
  %v485 = vunpack.c.h.b16 %v391
  %v486 = vunpack.c.l.b16 %v392
  %v487 = vunpack.c.h.b16 %v392
  %v488 = vunpack.c.l.b16 %v393
  %v489 = vunpack.c.h.b16 %v393
  %v490 = vpack.c.b16 %v430, %v426
  %v491 = vpack.c.b16 %v431, %v427
  %v492 = vpack.c.b16 %v432, %v428
  %v493 = vpack.c.b16 %v433, %v429
  %v494 = vpack.c.b16 %v438, %v434
  %v495 = vpack.c.b16 %v439, %v435
  %v496 = vpack.c.b16 %v440, %v436
  %v497 = vpack.c.b16 %v441, %v437
  %v498 = vpack.c.b16 %v446, %v442
  %v499 = vpack.c.b16 %v447, %v443
  %v500 = vpack.c.b16 %v448, %v444
  %v501 = vpack.c.b16 %v449, %v445
  %v502 = vpack.c.b16 %v454, %v450
  %v503 = vpack.c.b16 %v455, %v451
  %v504 = vpack.c.b16 %v456, %v452
  %v505 = vpack.c.b16 %v457, %v453
  %v506 = vpack.c.b16 %v462, %v458
  %v507 = vpack.c.b16 %v463, %v459
  %v508 = vpack.c.b16 %v464, %v460
  %v509 = vpack.c.b16 %v465, %v461
  %v510 = vpack.c.b16 %v470, %v466
  %v511 = vpack.c.b16 %v471, %v467
  %v512 = vpack.c.b16 %v472, %v468
  %v513 = vpack.c.b16 %v473, %v469
  %v514 = vpack.c.b16 %v478, %v474
  %v515 = vpack.c.b16 %v479, %v475
  %v516 = vpack.c.b16 %v480, %v476
  %v517 = vpack.c.b16 %v481, %v477
  %v518 = vpack.c.b16 %v486, %v482
  %v519 = vpack.c.b16 %v487, %v483
  %v520 = vpack.c.b16 %v488, %v484
  %v521 = vpack.c.b16 %v489, %v485
  %554 = vmatprep.subr.bf16.mxu0 %v519
  %555 = vmatpush1.bf16.msra.mxu0 %v518
  %556 = vmatprep.subr.bf16.mxu0 %v515
  %557 = vmatpush1.bf16.msra.mxu0 %v514
  %558 = vmatprep.subr.bf16.mxu0 %v511
  %559 = vmatpush1.bf16.msra.mxu0 %v510
  %560 = vmatprep.subr.bf16.mxu0 %v507
  %561 = vmatpush1.bf16.msra.mxu0 %v506
  %562 = vmatprep.subr.bf16.mxu0 %v503
  %563 = vmatpush1.bf16.msra.mxu0 %v502
  %564 = vmatprep.subr.bf16.mxu0 %v499
  %565 = vmatpush1.bf16.msra.mxu0 %v498
  %566 = vmatprep.subr.bf16.mxu0 %v495
  %567 = vmatpush1.bf16.msra.mxu0 %v494
  %568 = vmatprep.subr.bf16.mxu0 %v491
  %569 = vmatpush1.bf16.msra.mxu0 %v490
  %570 = vmatprep.subr.bf16.mxu0 0
  %571 = vmatpush2.bf16.msra.mxu0 0
  %572 = vmatprep.subr.bf16.mxu0 0
  %573 = vmatpush2.bf16.msra.mxu0 0
  %574 = vmatprep.subr.bf16.mxu0 0
  %575 = vmatpush2.bf16.msra.mxu0 0
  %576 = vmatprep.subr.bf16.mxu0 0
  %577 = vmatpush2.bf16.msra.mxu0 0
  %578 = vmatprep.subr.bf16.mxu0 0
  %579 = vmatpush2.bf16.msra.mxu0 0
  %580 = vmatprep.subr.bf16.mxu0 0
  %581 = vmatpush2.bf16.msra.mxu0 0
  %582 = vmatprep.subr.bf16.mxu0 0
  %583 = vmatpush2.bf16.msra.mxu0 0
  %584 = vmatprep.subr.bf16.mxu0 0
  %585 = vmatpush2.bf16.msra.mxu0 0
  %586 = vmatprep.mubr.bf16.mxu0 0
  %587 = vmatmul.mubr.bf16.gmra.mxu0 0
  %v588 = vpop.f32.mrf.mxu0
  %v589 = vadd.f32 0.0, %v588
  %v590 = vpop.f32.mrf.mxu0
  %v591 = vadd.f32 0.0, %v590
  %v592 = vpop.f32.mrf.mxu0
  %v593 = vpop.f32.mrf.mxu0
  %594 = vdwg.mxu0
  %595 = vmatprep.subr.bf16.mxu0 %v521
  %596 = vmatpush1.bf16.msra.mxu0 %v520
  %597 = vmatprep.subr.bf16.mxu0 %v517
  %598 = vmatpush1.bf16.msra.mxu0 %v516
  %599 = vmatprep.subr.bf16.mxu0 %v513
  %600 = vmatpush1.bf16.msra.mxu0 %v512
  %601 = vmatprep.subr.bf16.mxu0 %v509
  %602 = vmatpush1.bf16.msra.mxu0 %v508
  %603 = vmatprep.subr.bf16.mxu0 %v505
  %604 = vmatpush1.bf16.msra.mxu0 %v504
  %605 = vmatprep.subr.bf16.mxu0 %v501
  %606 = vmatpush1.bf16.msra.mxu0 %v500
  %607 = vmatprep.subr.bf16.mxu0 %v497
  %608 = vmatpush1.bf16.msra.mxu0 %v496
  %609 = vmatprep.subr.bf16.mxu0 %v493
  %610 = vmatpush1.bf16.msra.mxu0 %v492
  %611 = vmatprep.subr.bf16.mxu0 0
  %612 = vmatpush2.bf16.msra.mxu0 0
  %613 = vmatprep.subr.bf16.mxu0 0
  %614 = vmatpush2.bf16.msra.mxu0 0
  %615 = vmatprep.subr.bf16.mxu0 0
  %616 = vmatpush2.bf16.msra.mxu0 0
  %617 = vmatprep.subr.bf16.mxu0 0
  %618 = vmatpush2.bf16.msra.mxu0 0
  %619 = vmatprep.subr.bf16.mxu0 0
  %620 = vmatpush2.bf16.msra.mxu0 0
  %621 = vmatprep.subr.bf16.mxu0 0
  %622 = vmatpush2.bf16.msra.mxu0 0
  %623 = vmatprep.subr.bf16.mxu0 0
  %624 = vmatpush2.bf16.msra.mxu0 0
  %625 = vmatprep.subr.bf16.mxu0 0
  %626 = vmatpush2.bf16.msra.mxu0 0
  %627 = vmatprep.mubr.bf16.mxu0 0
  %628 = vmatmul.mubr.bf16.gmra.mxu0 0
  %v629 = vpop.f32.mrf.mxu0
  %v630 = vadd.f32 0.0, %v629
  %v631 = vpop.f32.mrf.mxu0
  %v632 = vadd.f32 0.0, %v631
  %v633 = vpop.f32.mrf.mxu0
  %v634 = vpop.f32.mrf.mxu0
  %635 = vdwg.mxu0
  %v636 = vadd.f32 %v358, %v589
  %v637 = vadd.f32 %v359, %v591
  %v638 = vadd.f32 %v360, %v630
  %v639 = vadd.f32 %v361, %v632
  %v640 = vxor.u32 %v636, 2147483648
  %v641 = vxor.u32 %v637, 2147483648
  %v642 = vxor.u32 %v638, 2147483648
  %v643 = vmul.f32 %v640, 1.442695
  %v644 = vpow.pop %v643
  %v645 = vmul.f32 %v641, 1.442695
  %v646 = vpow.pop %v645
  %v647 = vmul.f32 %v642, 1.442695
  %v648 = vpow.pop %v647
  %v649 = vadd.f32 %v644, 1.0
  %v650 = vadd.f32 %v646, 1.0
  %v651 = vadd.f32 %v648, 1.0
  %v652 = vrcp.pop %v649
  %v653 = vmul.f32 1.0, %v652
  %v654 = vrcp.pop %v650
  %v655 = vmul.f32 1.0, %v654
  %v656 = vrcp.pop %v651
  %v657 = vmul.f32 1.0, %v656
  %v658 = vtanh.pop %v639
  %v659 = vmul.f32 %v655, 0.0
  %v660 = vmul.f32 %v653, %v658
  %v661 = vadd.f32 %v659, %v660
  %v662 = vtanh.pop %v661
  %v663 = vmul.f32 %v657, %v662
  %v664 = vld [vmem:[#allocation2 + $0x20] sm:$0xff]
  %v665 = vld [vmem:[#allocation2 + $0x28] sm:$0xff]
  %v666 = vld [vmem:[#allocation2 + $0x30] sm:$0xff]
  %v667 = vld [vmem:[#allocation2 + $0x38] sm:$0xff]
  %v668 = vpack.c.bf16 %v663, %v663
  %669 = vmatprep.subr.bf16.mxu0 %v519
  %670 = vmatpush1.bf16.msra.mxu0 %v518
  %671 = vmatprep.subr.bf16.mxu0 %v515
  %672 = vmatpush1.bf16.msra.mxu0 %v514
  %673 = vmatprep.subr.bf16.mxu0 %v511
  %674 = vmatpush1.bf16.msra.mxu0 %v510
  %675 = vmatprep.subr.bf16.mxu0 %v507
  %676 = vmatpush1.bf16.msra.mxu0 %v506
  %677 = vmatprep.subr.bf16.mxu0 %v503
  %678 = vmatpush1.bf16.msra.mxu0 %v502
  %679 = vmatprep.subr.bf16.mxu0 %v499
  %680 = vmatpush1.bf16.msra.mxu0 %v498
  %681 = vmatprep.subr.bf16.mxu0 %v495
  %682 = vmatpush1.bf16.msra.mxu0 %v494
  %683 = vmatprep.subr.bf16.mxu0 %v491
  %684 = vmatpush1.bf16.msra.mxu0 %v490
  %685 = vmatprep.subr.bf16.mxu0 0
  %686 = vmatpush2.bf16.msra.mxu0 0
  %687 = vmatprep.subr.bf16.mxu0 0
  %688 = vmatpush2.bf16.msra.mxu0 0
  %689 = vmatprep.subr.bf16.mxu0 0
  %690 = vmatpush2.bf16.msra.mxu0 0
  %691 = vmatprep.subr.bf16.mxu0 0
  %692 = vmatpush2.bf16.msra.mxu0 0
  %693 = vmatprep.subr.bf16.mxu0 0
  %694 = vmatpush2.bf16.msra.mxu0 0
  %695 = vmatprep.subr.bf16.mxu0 0
  %696 = vmatpush2.bf16.msra.mxu0 0
  %697 = vmatprep.subr.bf16.mxu0 0
  %698 = vmatpush2.bf16.msra.mxu0 0
  %699 = vmatprep.subr.bf16.mxu0 0
  %700 = vmatpush2.bf16.msra.mxu0 0
  %701 = vmatprep.mubr.bf16.mxu0 0
  %702 = vmatmul.mubr.bf16.gmra.mxu0 %v668
  %v703 = vpop.f32.mrf.mxu0
  %v704 = vadd.f32 0.0, %v703
  %v705 = vpop.f32.mrf.mxu0
  %v706 = vadd.f32 0.0, %v705
  %v707 = vpop.f32.mrf.mxu0
  %v708 = vpop.f32.mrf.mxu0
  %709 = vdwg.mxu0
  %710 = vmatprep.subr.bf16.mxu0 %v521
  %711 = vmatpush1.bf16.msra.mxu0 %v520
  %712 = vmatprep.subr.bf16.mxu0 %v517
  %713 = vmatpush1.bf16.msra.mxu0 %v516
  %714 = vmatprep.subr.bf16.mxu0 %v513
  %715 = vmatpush1.bf16.msra.mxu0 %v512
  %716 = vmatprep.subr.bf16.mxu0 %v509
  %717 = vmatpush1.bf16.msra.mxu0 %v508
  %718 = vmatprep.subr.bf16.mxu0 %v505
  %719 = vmatpush1.bf16.msra.mxu0 %v504
  %720 = vmatprep.subr.bf16.mxu0 %v501
  %721 = vmatpush1.bf16.msra.mxu0 %v500
  %722 = vmatprep.subr.bf16.mxu0 %v497
  %723 = vmatpush1.bf16.msra.mxu0 %v496
  %724 = vmatprep.subr.bf16.mxu0 %v493
  %725 = vmatpush1.bf16.msra.mxu0 %v492
  %726 = vmatprep.subr.bf16.mxu0 0
  %727 = vmatpush2.bf16.msra.mxu0 0
  %728 = vmatprep.subr.bf16.mxu0 0
  %729 = vmatpush2.bf16.msra.mxu0 0
  %730 = vmatprep.subr.bf16.mxu0 0
  %731 = vmatpush2.bf16.msra.mxu0 0
  %732 = vmatprep.subr.bf16.mxu0 0
  %733 = vmatpush2.bf16.msra.mxu0 0
  %734 = vmatprep.subr.bf16.mxu0 0
  %735 = vmatpush2.bf16.msra.mxu0 0
  %736 = vmatprep.subr.bf16.mxu0 0
  %737 = vmatpush2.bf16.msra.mxu0 0
  %738 = vmatprep.subr.bf16.mxu0 0
  %739 = vmatpush2.bf16.msra.mxu0 0
  %740 = vmatprep.subr.bf16.mxu0 0
  %741 = vmatpush2.bf16.msra.mxu0 0
  %742 = vmatprep.mubr.bf16.mxu0 0
  %743 = vmatmul.mubr.bf16.gmra.mxu0 %v668
  %v744 = vpop.f32.mrf.mxu0
  %v745 = vadd.f32 0.0, %v744
  %v746 = vpop.f32.mrf.mxu0
  %v747 = vadd.f32 0.0, %v746
  %v748 = vpop.f32.mrf.mxu0
  %v749 = vpop.f32.mrf.mxu0
  %750 = vdwg.mxu0
  %v751 = vadd.f32 %v664, %v704
  %v752 = vadd.f32 %v665, %v706
  %v753 = vadd.f32 %v666, %v745
  %v754 = vadd.f32 %v667, %v747
  %v755 = vxor.u32 %v751, 2147483648
  %v756 = vxor.u32 %v752, 2147483648
  %v757 = vxor.u32 %v753, 2147483648
  %v758 = vmul.f32 %v755, 1.442695
  %v759 = vpow.pop %v758
  %v760 = vmul.f32 %v756, 1.442695
  %v761 = vpow.pop %v760
  %v762 = vmul.f32 %v757, 1.442695
  %v763 = vpow.pop %v762
  %v764 = vadd.f32 %v759, 1.0
  %v765 = vadd.f32 %v761, 1.0
  %v766 = vadd.f32 %v763, 1.0
  %v767 = vrcp.pop %v764
  %v768 = vmul.f32 1.0, %v767
  %v769 = vrcp.pop %v765
  %v770 = vmul.f32 1.0, %v769
  %v771 = vrcp.pop %v766
  %v772 = vmul.f32 1.0, %v771
  %v773 = vtanh.pop %v754
  %v774 = vmul.f32 %v770, %v661
  %v775 = vmul.f32 %v768, %v773
  %v776 = vadd.f32 %v774, %v775
  %v777 = vtanh.pop %v776
  %v778 = vmul.f32 %v772, %v777
  %v779 = vld [vmem:[#allocation2 + $0x40] sm:$0xff]
  %v780 = vld [vmem:[#allocation2 + $0x48] sm:$0xff]
  %v781 = vld [vmem:[#allocation2 + $0x50] sm:$0xff]
  %v782 = vld [vmem:[#allocation2 + $0x58] sm:$0xff]
  %v783 = vpack.c.bf16 %v778, %v778
  %784 = vmatprep.subr.bf16.mxu0 %v519
  %785 = vmatpush1.bf16.msra.mxu0 %v518
  %786 = vmatprep.subr.bf16.mxu0 %v515
  %787 = vmatpush1.bf16.msra.mxu0 %v514
  %788 = vmatprep.subr.bf16.mxu0 %v511
  %789 = vmatpush1.bf16.msra.mxu0 %v510
  %790 = vmatprep.subr.bf16.mxu0 %v507
  %791 = vmatpush1.bf16.msra.mxu0 %v506
  %792 = vmatprep.subr.bf16.mxu0 %v503
  %793 = vmatpush1.bf16.msra.mxu0 %v502
  %794 = vmatprep.subr.bf16.mxu0 %v499
  %795 = vmatpush1.bf16.msra.mxu0 %v498
  %796 = vmatprep.subr.bf16.mxu0 %v495
  %797 = vmatpush1.bf16.msra.mxu0 %v494
  %798 = vmatprep.subr.bf16.mxu0 %v491
  %799 = vmatpush1.bf16.msra.mxu0 %v490
  %800 = vmatprep.subr.bf16.mxu0 0
  %801 = vmatpush2.bf16.msra.mxu0 0
  %802 = vmatprep.subr.bf16.mxu0 0
  %803 = vmatpush2.bf16.msra.mxu0 0
  %804 = vmatprep.subr.bf16.mxu0 0
  %805 = vmatpush2.bf16.msra.mxu0 0
  %806 = vmatprep.subr.bf16.mxu0 0
  %807 = vmatpush2.bf16.msra.mxu0 0
  %808 = vmatprep.subr.bf16.mxu0 0
  %809 = vmatpush2.bf16.msra.mxu0 0
  %810 = vmatprep.subr.bf16.mxu0 0
  %811 = vmatpush2.bf16.msra.mxu0 0
  %812 = vmatprep.subr.bf16.mxu0 0
  %813 = vmatpush2.bf16.msra.mxu0 0
  %814 = vmatprep.subr.bf16.mxu0 0
  %815 = vmatpush2.bf16.msra.mxu0 0
  %816 = vmatprep.mubr.bf16.mxu0 0
  %817 = vmatmul.mubr.bf16.gmra.mxu0 %v783
  %v818 = vpop.f32.mrf.mxu0
  %v819 = vadd.f32 0.0, %v818
  %v820 = vpop.f32.mrf.mxu0
  %v821 = vadd.f32 0.0, %v820
  %v822 = vpop.f32.mrf.mxu0
  %v823 = vpop.f32.mrf.mxu0
  %824 = vdwg.mxu0
  %825 = vmatprep.subr.bf16.mxu0 %v521
  %826 = vmatpush1.bf16.msra.mxu0 %v520
  %827 = vmatprep.subr.bf16.mxu0 %v517
  %828 = vmatpush1.bf16.msra.mxu0 %v516
  %829 = vmatprep.subr.bf16.mxu0 %v513
  %830 = vmatpush1.bf16.msra.mxu0 %v512
  %831 = vmatprep.subr.bf16.mxu0 %v509
  %832 = vmatpush1.bf16.msra.mxu0 %v508
  %833 = vmatprep.subr.bf16.mxu0 %v505
  %834 = vmatpush1.bf16.msra.mxu0 %v504
  %835 = vmatprep.subr.bf16.mxu0 %v501
  %836 = vmatpush1.bf16.msra.mxu0 %v500
  %837 = vmatprep.subr.bf16.mxu0 %v497
  %838 = vmatpush1.bf16.msra.mxu0 %v496
  %839 = vmatprep.subr.bf16.mxu0 %v493
  %840 = vmatpush1.bf16.msra.mxu0 %v492
  %841 = vmatprep.subr.bf16.mxu0 0
  %842 = vmatpush2.bf16.msra.mxu0 0
  %843 = vmatprep.subr.bf16.mxu0 0
  %844 = vmatpush2.bf16.msra.mxu0 0
  %845 = vmatprep.subr.bf16.mxu0 0
  %846 = vmatpush2.bf16.msra.mxu0 0
  %847 = vmatprep.subr.bf16.mxu0 0
  %848 = vmatpush2.bf16.msra.mxu0 0
  %849 = vmatprep.subr.bf16.mxu0 0
  %850 = vmatpush2.bf16.msra.mxu0 0
  %851 = vmatprep.subr.bf16.mxu0 0
  %852 = vmatpush2.bf16.msra.mxu0 0
  %853 = vmatprep.subr.bf16.mxu0 0
  %854 = vmatpush2.bf16.msra.mxu0 0
  %855 = vmatprep.subr.bf16.mxu0 0
  %856 = vmatpush2.bf16.msra.mxu0 0
  %857 = vmatprep.mubr.bf16.mxu0 0
  %858 = vmatmul.mubr.bf16.gmra.mxu0 %v783
  %v859 = vpop.f32.mrf.mxu0
  %v860 = vadd.f32 0.0, %v859
  %v861 = vpop.f32.mrf.mxu0
  %v862 = vadd.f32 0.0, %v861
  %v863 = vpop.f32.mrf.mxu0
  %v864 = vpop.f32.mrf.mxu0
  %865 = vdwg.mxu0
  %v866 = vadd.f32 %v779, %v819
  %v867 = vadd.f32 %v780, %v821
  %v868 = vadd.f32 %v781, %v860
  %v869 = vadd.f32 %v782, %v862
  %v870 = vxor.u32 %v866, 2147483648
  %v871 = vxor.u32 %v867, 2147483648
  %v872 = vxor.u32 %v868, 2147483648
  %v873 = vmul.f32 %v870, 1.442695
  %v874 = vpow.pop %v873
  %v875 = vmul.f32 %v871, 1.442695
  %v876 = vpow.pop %v875
  %v877 = vmul.f32 %v872, 1.442695
  %v878 = vpow.pop %v877
  %v879 = vadd.f32 %v874, 1.0
  %v880 = vadd.f32 %v876, 1.0
  %v881 = vadd.f32 %v878, 1.0
  %v882 = vrcp.pop %v879
  %v883 = vmul.f32 1.0, %v882
  %v884 = vrcp.pop %v880
  %v885 = vmul.f32 1.0, %v884
  %v886 = vrcp.pop %v881
  %v887 = vmul.f32 1.0, %v886
  %v888 = vtanh.pop %v869
  %v889 = vmul.f32 %v885, %v776
  %v890 = vmul.f32 %v883, %v888
  %v891 = vadd.f32 %v889, %v890
  %v892 = vtanh.pop %v891
  %v893 = vmul.f32 %v887, %v892
  %v894 = vld [vmem:[#allocation2 + $0x60] sm:$0xff]
  %v895 = vld [vmem:[#allocation2 + $0x68] sm:$0xff]
  %v896 = vld [vmem:[#allocation2 + $0x70] sm:$0xff]
  %v897 = vld [vmem:[#allocation2 + $0x78] sm:$0xff]
  %v898 = vpack.c.bf16 %v893, %v893
  %899 = vmatprep.subr.bf16.mxu0 %v519
  %900 = vmatpush1.bf16.msra.mxu0 %v518
  %901 = vmatprep.subr.bf16.mxu0 %v515
  %902 = vmatpush1.bf16.msra.mxu0 %v514
  %903 = vmatprep.subr.bf16.mxu0 %v511
  %904 = vmatpush1.bf16.msra.mxu0 %v510
  %905 = vmatprep.subr.bf16.mxu0 %v507
  %906 = vmatpush1.bf16.msra.mxu0 %v506
  %907 = vmatprep.subr.bf16.mxu0 %v503
  %908 = vmatpush1.bf16.msra.mxu0 %v502
  %909 = vmatprep.subr.bf16.mxu0 %v499
  %910 = vmatpush1.bf16.msra.mxu0 %v498
  %911 = vmatprep.subr.bf16.mxu0 %v495
  %912 = vmatpush1.bf16.msra.mxu0 %v494
  %913 = vmatprep.subr.bf16.mxu0 %v491
  %914 = vmatpush1.bf16.msra.mxu0 %v490
  %915 = vmatprep.subr.bf16.mxu0 0
  %916 = vmatpush2.bf16.msra.mxu0 0
  %917 = vmatprep.subr.bf16.mxu0 0
  %918 = vmatpush2.bf16.msra.mxu0 0
  %919 = vmatprep.subr.bf16.mxu0 0
  %920 = vmatpush2.bf16.msra.mxu0 0
  %921 = vmatprep.subr.bf16.mxu0 0
  %922 = vmatpush2.bf16.msra.mxu0 0
  %923 = vmatprep.subr.bf16.mxu0 0
  %924 = vmatpush2.bf16.msra.mxu0 0
  %925 = vmatprep.subr.bf16.mxu0 0
  %926 = vmatpush2.bf16.msra.mxu0 0
  %927 = vmatprep.subr.bf16.mxu0 0
  %928 = vmatpush2.bf16.msra.mxu0 0
  %929 = vmatprep.subr.bf16.mxu0 0
  %930 = vmatpush2.bf16.msra.mxu0 0
  %931 = vmatprep.mubr.bf16.mxu0 0
  %932 = vmatmul.mubr.bf16.gmra.mxu0 %v898
  %v933 = vpop.f32.mrf.mxu0
  %v934 = vadd.f32 0.0, %v933
  %v935 = vpop.f32.mrf.mxu0
  %v936 = vadd.f32 0.0, %v935
  %v937 = vpop.f32.mrf.mxu0
  %v938 = vpop.f32.mrf.mxu0
  %939 = vdwg.mxu0
  %940 = vmatprep.subr.bf16.mxu0 %v521
  %941 = vmatpush1.bf16.msra.mxu0 %v520
  %942 = vmatprep.subr.bf16.mxu0 %v517
  %943 = vmatpush1.bf16.msra.mxu0 %v516
  %944 = vmatprep.subr.bf16.mxu0 %v513
  %945 = vmatpush1.bf16.msra.mxu0 %v512
  %946 = vmatprep.subr.bf16.mxu0 %v509
  %947 = vmatpush1.bf16.msra.mxu0 %v508
  %948 = vmatprep.subr.bf16.mxu0 %v505
  %949 = vmatpush1.bf16.msra.mxu0 %v504
  %950 = vmatprep.subr.bf16.mxu0 %v501
  %951 = vmatpush1.bf16.msra.mxu0 %v500
  %952 = vmatprep.subr.bf16.mxu0 %v497
  %953 = vmatpush1.bf16.msra.mxu0 %v496
  %954 = vmatprep.subr.bf16.mxu0 %v493
  %955 = vmatpush1.bf16.msra.mxu0 %v492
  %956 = vmatprep.subr.bf16.mxu0 0
  %957 = vmatpush2.bf16.msra.mxu0 0
  %958 = vmatprep.subr.bf16.mxu0 0
  %959 = vmatpush2.bf16.msra.mxu0 0
  %960 = vmatprep.subr.bf16.mxu0 0
  %961 = vmatpush2.bf16.msra.mxu0 0
  %962 = vmatprep.subr.bf16.mxu0 0
  %963 = vmatpush2.bf16.msra.mxu0 0
  %964 = vmatprep.subr.bf16.mxu0 0
  %965 = vmatpush2.bf16.msra.mxu0 0
  %966 = vmatprep.subr.bf16.mxu0 0
  %967 = vmatpush2.bf16.msra.mxu0 0
  %968 = vmatprep.subr.bf16.mxu0 0
  %969 = vmatpush2.bf16.msra.mxu0 0
  %970 = vmatprep.subr.bf16.mxu0 0
  %971 = vmatpush2.bf16.msra.mxu0 0
  %972 = vmatprep.mubr.bf16.mxu0 0
  %973 = vmatmul.mubr.bf16.gmra.mxu0 %v898
  %v974 = vpop.f32.mrf.mxu0
  %v975 = vadd.f32 0.0, %v974
  %v976 = vpop.f32.mrf.mxu0
  %v977 = vadd.f32 0.0, %v976
  %v978 = vpop.f32.mrf.mxu0
  %v979 = vpop.f32.mrf.mxu0
  %980 = vdwg.mxu0
  %v981 = vadd.f32 %v894, %v934
  %v982 = vadd.f32 %v895, %v936
  %v983 = vadd.f32 %v896, %v975
  %v984 = vadd.f32 %v897, %v977
  %v985 = vxor.u32 %v981, 2147483648
  %v986 = vxor.u32 %v982, 2147483648
  %v987 = vxor.u32 %v983, 2147483648
  %v988 = vmul.f32 %v985, 1.442695
  %v989 = vpow.pop %v988
  %v990 = vmul.f32 %v986, 1.442695
  %v991 = vpow.pop %v990
  %v992 = vmul.f32 %v987, 1.442695
  %v993 = vpow.pop %v992
  %v994 = vadd.f32 %v989, 1.0
  %v995 = vadd.f32 %v991, 1.0
  %v996 = vadd.f32 %v993, 1.0
  %v997 = vrcp.pop %v994
  %v998 = vmul.f32 1.0, %v997
  %v999 = vrcp.pop %v995
  %v1000 = vmul.f32 1.0, %v999
  %v1001 = vrcp.pop %v996
  %v1002 = vmul.f32 1.0, %v1001
  %v1003 = vtanh.pop %v984
  %v1004 = vmul.f32 %v1000, %v891
  %v1005 = vmul.f32 %v998, %v1003
  %v1006 = vadd.f32 %v1004, %v1005
  %v1007 = vtanh.pop %v1006
  %v1008 = vmul.f32 %v1002, %v1007
  %v1009 = vld [vmem:[#allocation2 + $0x80] sm:$0xff]
  %v1010 = vld [vmem:[#allocation2 + $0x88] sm:$0xff]
  %v1011 = vld [vmem:[#allocation2 + $0x90] sm:$0xff]
  %v1012 = vld [vmem:[#allocation2 + $0x98] sm:$0xff]
  %v1013 = vpack.c.bf16 %v1008, %v1008
  %1014 = vmatprep.subr.bf16.mxu0 %v519
  %1015 = vmatpush1.bf16.msra.mxu0 %v518
  %1016 = vmatprep.subr.bf16.mxu0 %v515
  %1017 = vmatpush1.bf16.msra.mxu0 %v514
  %1018 = vmatprep.subr.bf16.mxu0 %v511
  %1019 = vmatpush1.bf16.msra.mxu0 %v510
  %1020 = vmatprep.subr.bf16.mxu0 %v507
  %1021 = vmatpush1.bf16.msra.mxu0 %v506
  %1022 = vmatprep.subr.bf16.mxu0 %v503
  %1023 = vmatpush1.bf16.msra.mxu0 %v502
  %1024 = vmatprep.subr.bf16.mxu0 %v499
  %1025 = vmatpush1.bf16.msra.mxu0 %v498
  %1026 = vmatprep.subr.bf16.mxu0 %v495
  %1027 = vmatpush1.bf16.msra.mxu0 %v494
  %1028 = vmatprep.subr.bf16.mxu0 %v491
  %1029 = vmatpush1.bf16.msra.mxu0 %v490
  %1030 = vmatprep.subr.bf16.mxu0 0
  %1031 = vmatpush2.bf16.msra.mxu0 0
  %1032 = vmatprep.subr.bf16.mxu0 0
  %1033 = vmatpush2.bf16.msra.mxu0 0
  %1034 = vmatprep.subr.bf16.mxu0 0
  %1035 = vmatpush2.bf16.msra.mxu0 0
  %1036 = vmatprep.subr.bf16.mxu0 0
  %1037 = vmatpush2.bf16.msra.mxu0 0
  %1038 = vmatprep.subr.bf16.mxu0 0
  %1039 = vmatpush2.bf16.msra.mxu0 0
  %1040 = vmatprep.subr.bf16.mxu0 0
  %1041 = vmatpush2.bf16.msra.mxu0 0
  %1042 = vmatprep.subr.bf16.mxu0 0
  %1043 = vmatpush2.bf16.msra.mxu0 0
  %1044 = vmatprep.subr.bf16.mxu0 0
  %1045 = vmatpush2.bf16.msra.mxu0 0
  %1046 = vmatprep.mubr.bf16.mxu0 0
  %1047 = vmatmul.mubr.bf16.gmra.mxu0 %v1013
  %v1048 = vpop.f32.mrf.mxu0
  %v1049 = vadd.f32 0.0, %v1048
  %v1050 = vpop.f32.mrf.mxu0
  %v1051 = vadd.f32 0.0, %v1050
  %v1052 = vpop.f32.mrf.mxu0
  %v1053 = vpop.f32.mrf.mxu0
  %1054 = vdwg.mxu0
  %1055 = vmatprep.subr.bf16.mxu0 %v521
  %1056 = vmatpush1.bf16.msra.mxu0 %v520
  %1057 = vmatprep.subr.bf16.mxu0 %v517
  %1058 = vmatpush1.bf16.msra.mxu0 %v516
  %1059 = vmatprep.subr.bf16.mxu0 %v513
  %1060 = vmatpush1.bf16.msra.mxu0 %v512
  %1061 = vmatprep.subr.bf16.mxu0 %v509
  %1062 = vmatpush1.bf16.msra.mxu0 %v508
  %1063 = vmatprep.subr.bf16.mxu0 %v505
  %1064 = vmatpush1.bf16.msra.mxu0 %v504
  %1065 = vmatprep.subr.bf16.mxu0 %v501
  %1066 = vmatpush1.bf16.msra.mxu0 %v500
  %1067 = vmatprep.subr.bf16.mxu0 %v497
  %1068 = vmatpush1.bf16.msra.mxu0 %v496
  %1069 = vmatprep.subr.bf16.mxu0 %v493
  %1070 = vmatpush1.bf16.msra.mxu0 %v492
  %1071 = vmatprep.subr.bf16.mxu0 0
  %1072 = vmatpush2.bf16.msra.mxu0 0
  %1073 = vmatprep.subr.bf16.mxu0 0
  %1074 = vmatpush2.bf16.msra.mxu0 0
  %1075 = vmatprep.subr.bf16.mxu0 0
  %1076 = vmatpush2.bf16.msra.mxu0 0
  %1077 = vmatprep.subr.bf16.mxu0 0
  %1078 = vmatpush2.bf16.msra.mxu0 0
  %1079 = vmatprep.subr.bf16.mxu0 0
  %1080 = vmatpush2.bf16.msra.mxu0 0
  %1081 = vmatprep.subr.bf16.mxu0 0
  %1082 = vmatpush2.bf16.msra.mxu0 0
  %1083 = vmatprep.subr.bf16.mxu0 0
  %1084 = vmatpush2.bf16.msra.mxu0 0
  %1085 = vmatprep.subr.bf16.mxu0 0
  %1086 = vmatpush2.bf16.msra.mxu0 0
  %1087 = vmatprep.mubr.bf16.mxu0 0
  %1088 = vmatmul.mubr.bf16.gmra.mxu0 %v1013
  %v1089 = vpop.f32.mrf.mxu0
  %v1090 = vadd.f32 0.0, %v1089
  %v1091 = vpop.f32.mrf.mxu0
  %v1092 = vadd.f32 0.0, %v1091
  %v1093 = vpop.f32.mrf.mxu0
  %v1094 = vpop.f32.mrf.mxu0
  %1095 = vdwg.mxu0
  %v1096 = vadd.f32 %v1009, %v1049
  %v1097 = vadd.f32 %v1010, %v1051
  %v1098 = vadd.f32 %v1011, %v1090
  %v1099 = vadd.f32 %v1012, %v1092
  %v1100 = vxor.u32 %v1096, 2147483648
  %v1101 = vxor.u32 %v1097, 2147483648
  %v1102 = vxor.u32 %v1098, 2147483648
  %v1103 = vmul.f32 %v1100, 1.442695
  %v1104 = vpow.pop %v1103
  %v1105 = vmul.f32 %v1101, 1.442695
  %v1106 = vpow.pop %v1105
  %v1107 = vmul.f32 %v1102, 1.442695
  %v1108 = vpow.pop %v1107
  %v1109 = vadd.f32 %v1104, 1.0
  %v1110 = vadd.f32 %v1106, 1.0
  %v1111 = vadd.f32 %v1108, 1.0
  %v1112 = vrcp.pop %v1109
  %v1113 = vmul.f32 1.0, %v1112
  %v1114 = vrcp.pop %v1110
  %v1115 = vmul.f32 1.0, %v1114
  %v1116 = vrcp.pop %v1111
  %v1117 = vmul.f32 1.0, %v1116
  %v1118 = vtanh.pop %v1099
  %v1119 = vmul.f32 %v1115, %v1006
  %v1120 = vmul.f32 %v1113, %v1118
  %v1121 = vadd.f32 %v1119, %v1120
  %v1122 = vtanh.pop %v1121
  %v1123 = vmul.f32 %v1117, %v1122
  %v1124 = vld [vmem:[#allocation2 + $0xa0] sm:$0xff]
  %v1125 = vld [vmem:[#allocation2 + $0xa8] sm:$0xff]
  %v1126 = vld [vmem:[#allocation2 + $0xb0] sm:$0xff]
  %v1127 = vld [vmem:[#allocation2 + $0xb8] sm:$0xff]
  %v1128 = vpack.c.bf16 %v1123, %v1123
  %1129 = vmatprep.subr.bf16.mxu0 %v519
  %1130 = vmatpush1.bf16.msra.mxu0 %v518
  %1131 = vmatprep.subr.bf16.mxu0 %v515
  %1132 = vmatpush1.bf16.msra.mxu0 %v514
  %1133 = vmatprep.subr.bf16.mxu0 %v511
  %1134 = vmatpush1.bf16.msra.mxu0 %v510
  %1135 = vmatprep.subr.bf16.mxu0 %v507
  %1136 = vmatpush1.bf16.msra.mxu0 %v506
  %1137 = vmatprep.subr.bf16.mxu0 %v503
  %1138 = vmatpush1.bf16.msra.mxu0 %v502
  %1139 = vmatprep.subr.bf16.mxu0 %v499
  %1140 = vmatpush1.bf16.msra.mxu0 %v498
  %1141 = vmatprep.subr.bf16.mxu0 %v495
  %1142 = vmatpush1.bf16.msra.mxu0 %v494
  %1143 = vmatprep.subr.bf16.mxu0 %v491
  %1144 = vmatpush1.bf16.msra.mxu0 %v490
  %1145 = vmatprep.subr.bf16.mxu0 0
  %1146 = vmatpush2.bf16.msra.mxu0 0
  %1147 = vmatprep.subr.bf16.mxu0 0
  %1148 = vmatpush2.bf16.msra.mxu0 0
  %1149 = vmatprep.subr.bf16.mxu0 0
  %1150 = vmatpush2.bf16.msra.mxu0 0
  %1151 = vmatprep.subr.bf16.mxu0 0
  %1152 = vmatpush2.bf16.msra.mxu0 0
  %1153 = vmatprep.subr.bf16.mxu0 0
  %1154 = vmatpush2.bf16.msra.mxu0 0
  %1155 = vmatprep.subr.bf16.mxu0 0
  %1156 = vmatpush2.bf16.msra.mxu0 0
  %1157 = vmatprep.subr.bf16.mxu0 0
  %1158 = vmatpush2.bf16.msra.mxu0 0
  %1159 = vmatprep.subr.bf16.mxu0 0
  %1160 = vmatpush2.bf16.msra.mxu0 0
  %1161 = vmatprep.mubr.bf16.mxu0 0
  %1162 = vmatmul.mubr.bf16.gmra.mxu0 %v1128
  %v1163 = vpop.f32.mrf.mxu0
  %v1164 = vadd.f32 0.0, %v1163
  %v1165 = vpop.f32.mrf.mxu0
  %v1166 = vadd.f32 0.0, %v1165
  %v1167 = vpop.f32.mrf.mxu0
  %v1168 = vpop.f32.mrf.mxu0
  %1169 = vdwg.mxu0
  %1170 = vmatprep.subr.bf16.mxu0 %v521
  %1171 = vmatpush1.bf16.msra.mxu0 %v520
  %1172 = vmatprep.subr.bf16.mxu0 %v517
  %1173 = vmatpush1.bf16.msra.mxu0 %v516
  %1174 = vmatprep.subr.bf16.mxu0 %v513
  %1175 = vmatpush1.bf16.msra.mxu0 %v512
  %1176 = vmatprep.subr.bf16.mxu0 %v509
  %1177 = vmatpush1.bf16.msra.mxu0 %v508
  %1178 = vmatprep.subr.bf16.mxu0 %v505
  %1179 = vmatpush1.bf16.msra.mxu0 %v504
  %1180 = vmatprep.subr.bf16.mxu0 %v501
  %1181 = vmatpush1.bf16.msra.mxu0 %v500
  %1182 = vmatprep.subr.bf16.mxu0 %v497
  %1183 = vmatpush1.bf16.msra.mxu0 %v496
  %1184 = vmatprep.subr.bf16.mxu0 %v493
  %1185 = vmatpush1.bf16.msra.mxu0 %v492
  %1186 = vmatprep.subr.bf16.mxu0 0
  %1187 = vmatpush2.bf16.msra.mxu0 0
  %1188 = vmatprep.subr.bf16.mxu0 0
  %1189 = vmatpush2.bf16.msra.mxu0 0
  %1190 = vmatprep.subr.bf16.mxu0 0
  %1191 = vmatpush2.bf16.msra.mxu0 0
  %1192 = vmatprep.subr.bf16.mxu0 0
  %1193 = vmatpush2.bf16.msra.mxu0 0
  %1194 = vmatprep.subr.bf16.mxu0 0
  %1195 = vmatpush2.bf16.msra.mxu0 0
  %1196 = vmatprep.subr.bf16.mxu0 0
  %1197 = vmatpush2.bf16.msra.mxu0 0
  %1198 = vmatprep.subr.bf16.mxu0 0
  %1199 = vmatpush2.bf16.msra.mxu0 0
  %1200 = vmatprep.subr.bf16.mxu0 0
  %1201 = vmatpush2.bf16.msra.mxu0 0
  %1202 = vmatprep.mubr.bf16.mxu0 0
  %1203 = vmatmul.mubr.bf16.gmra.mxu0 %v1128
  %v1204 = vpop.f32.mrf.mxu0
  %v1205 = vadd.f32 0.0, %v1204
  %v1206 = vpop.f32.mrf.mxu0
  %v1207 = vadd.f32 0.0, %v1206
  %v1208 = vpop.f32.mrf.mxu0
  %v1209 = vpop.f32.mrf.mxu0
  %1210 = vdwg.mxu0
  %v1211 = vadd.f32 %v1124, %v1164
  %v1212 = vadd.f32 %v1125, %v1166
  %v1213 = vadd.f32 %v1126, %v1205
  %v1214 = vadd.f32 %v1127, %v1207
  %v1215 = vxor.u32 %v1211, 2147483648
  %v1216 = vxor.u32 %v1212, 2147483648
  %v1217 = vxor.u32 %v1213, 2147483648
  %v1218 = vmul.f32 %v1215, 1.442695
  %v1219 = vpow.pop %v1218
  %v1220 = vmul.f32 %v1216, 1.442695
  %v1221 = vpow.pop %v1220
  %v1222 = vmul.f32 %v1217, 1.442695
  %v1223 = vpow.pop %v1222
  %v1224 = vadd.f32 %v1219, 1.0
  %v1225 = vadd.f32 %v1221, 1.0
  %v1226 = vadd.f32 %v1223, 1.0
  %v1227 = vrcp.pop %v1224
  %v1228 = vmul.f32 1.0, %v1227
  %v1229 = vrcp.pop %v1225
  %v1230 = vmul.f32 1.0, %v1229
  %v1231 = vrcp.pop %v1226
  %v1232 = vmul.f32 1.0, %v1231
  %v1233 = vtanh.pop %v1214
  %v1234 = vmul.f32 %v1230, %v1121
  %v1235 = vmul.f32 %v1228, %v1233
  %v1236 = vadd.f32 %v1234, %v1235
  %v1237 = vtanh.pop %v1236
  %v1238 = vmul.f32 %v1232, %v1237
  %v1239 = vld [vmem:[#allocation2 + $0xc0] sm:$0xff]
  %v1240 = vld [vmem:[#allocation2 + $0xc8] sm:$0xff]
  %v1241 = vld [vmem:[#allocation2 + $0xd0] sm:$0xff]
  %v1242 = vld [vmem:[#allocation2 + $0xd8] sm:$0xff]
  %v1243 = vpack.c.bf16 %v1238, %v1238
  %1244 = vmatprep.subr.bf16.mxu0 %v519
  %1245 = vmatpush1.bf16.msra.mxu0 %v518
  %1246 = vmatprep.subr.bf16.mxu0 %v515
  %1247 = vmatpush1.bf16.msra.mxu0 %v514
  %1248 = vmatprep.subr.bf16.mxu0 %v511
  %1249 = vmatpush1.bf16.msra.mxu0 %v510
  %1250 = vmatprep.subr.bf16.mxu0 %v507
  %1251 = vmatpush1.bf16.msra.mxu0 %v506
  %1252 = vmatprep.subr.bf16.mxu0 %v503
  %1253 = vmatpush1.bf16.msra.mxu0 %v502
  %1254 = vmatprep.subr.bf16.mxu0 %v499
  %1255 = vmatpush1.bf16.msra.mxu0 %v498
  %1256 = vmatprep.subr.bf16.mxu0 %v495
  %1257 = vmatpush1.bf16.msra.mxu0 %v494
  %1258 = vmatprep.subr.bf16.mxu0 %v491
  %1259 = vmatpush1.bf16.msra.mxu0 %v490
  %1260 = vmatprep.subr.bf16.mxu0 0
  %1261 = vmatpush2.bf16.msra.mxu0 0
  %1262 = vmatprep.subr.bf16.mxu0 0
  %1263 = vmatpush2.bf16.msra.mxu0 0
  %1264 = vmatprep.subr.bf16.mxu0 0
  %1265 = vmatpush2.bf16.msra.mxu0 0
  %1266 = vmatprep.subr.bf16.mxu0 0
  %1267 = vmatpush2.bf16.msra.mxu0 0
  %1268 = vmatprep.subr.bf16.mxu0 0
  %1269 = vmatpush2.bf16.msra.mxu0 0
  %1270 = vmatprep.subr.bf16.mxu0 0
  %1271 = vmatpush2.bf16.msra.mxu0 0
  %1272 = vmatprep.subr.bf16.mxu0 0
  %1273 = vmatpush2.bf16.msra.mxu0 0
  %1274 = vmatprep.subr.bf16.mxu0 0
  %1275 = vmatpush2.bf16.msra.mxu0 0
  %1276 = vmatprep.mubr.bf16.mxu0 0
  %1277 = vmatmul.mubr.bf16.gmra.mxu0 %v1243
  %v1278 = vpop.f32.mrf.mxu0
  %v1279 = vadd.f32 0.0, %v1278
  %v1280 = vpop.f32.mrf.mxu0
  %v1281 = vadd.f32 0.0, %v1280
  %v1282 = vpop.f32.mrf.mxu0
  %v1283 = vpop.f32.mrf.mxu0
  %1284 = vdwg.mxu0
  %1285 = vmatprep.subr.bf16.mxu0 %v521
  %1286 = vmatpush1.bf16.msra.mxu0 %v520
  %1287 = vmatprep.subr.bf16.mxu0 %v517
  %1288 = vmatpush1.bf16.msra.mxu0 %v516
  %1289 = vmatprep.subr.bf16.mxu0 %v513
  %1290 = vmatpush1.bf16.msra.mxu0 %v512
  %1291 = vmatprep.subr.bf16.mxu0 %v509
  %1292 = vmatpush1.bf16.msra.mxu0 %v508
  %1293 = vmatprep.subr.bf16.mxu0 %v505
  %1294 = vmatpush1.bf16.msra.mxu0 %v504
  %1295 = vmatprep.subr.bf16.mxu0 %v501
  %1296 = vmatpush1.bf16.msra.mxu0 %v500
  %1297 = vmatprep.subr.bf16.mxu0 %v497
  %1298 = vmatpush1.bf16.msra.mxu0 %v496
  %1299 = vmatprep.subr.bf16.mxu0 %v493
  %1300 = vmatpush1.bf16.msra.mxu0 %v492
  %1301 = vmatprep.subr.bf16.mxu0 0
  %1302 = vmatpush2.bf16.msra.mxu0 0
  %1303 = vmatprep.subr.bf16.mxu0 0
  %1304 = vmatpush2.bf16.msra.mxu0 0
  %1305 = vmatprep.subr.bf16.mxu0 0
  %1306 = vmatpush2.bf16.msra.mxu0 0
  %1307 = vmatprep.subr.bf16.mxu0 0
  %1308 = vmatpush2.bf16.msra.mxu0 0
  %1309 = vmatprep.subr.bf16.mxu0 0
  %1310 = vmatpush2.bf16.msra.mxu0 0
  %1311 = vmatprep.subr.bf16.mxu0 0
  %1312 = vmatpush2.bf16.msra.mxu0 0
  %1313 = vmatprep.subr.bf16.mxu0 0
  %1314 = vmatpush2.bf16.msra.mxu0 0
  %1315 = vmatprep.subr.bf16.mxu0 0
  %1316 = vmatpush2.bf16.msra.mxu0 0
  %1317 = vmatprep.mubr.bf16.mxu0 0
  %1318 = vmatmul.mubr.bf16.gmra.mxu0 %v1243
  %v1319 = vpop.f32.mrf.mxu0
  %v1320 = vadd.f32 0.0, %v1319
  %v1321 = vpop.f32.mrf.mxu0
  %v1322 = vadd.f32 0.0, %v1321
  %v1323 = vpop.f32.mrf.mxu0
  %v1324 = vpop.f32.mrf.mxu0
  %1325 = vdwg.mxu0
  %v1326 = vadd.f32 %v1239, %v1279
  %v1327 = vadd.f32 %v1240, %v1281
  %v1328 = vadd.f32 %v1241, %v1320
  %v1329 = vadd.f32 %v1242, %v1322
  %v1330 = vxor.u32 %v1326, 2147483648
  %v1331 = vxor.u32 %v1327, 2147483648
  %v1332 = vxor.u32 %v1328, 2147483648
  %v1333 = vmul.f32 %v1330, 1.442695
  %v1334 = vpow.pop %v1333
  %v1335 = vmul.f32 %v1331, 1.442695
  %v1336 = vpow.pop %v1335
  %v1337 = vmul.f32 %v1332, 1.442695
  %v1338 = vpow.pop %v1337
  %v1339 = vadd.f32 %v1334, 1.0
  %v1340 = vadd.f32 %v1336, 1.0
  %v1341 = vadd.f32 %v1338, 1.0
  %v1342 = vrcp.pop %v1339
  %v1343 = vmul.f32 1.0, %v1342
  %v1344 = vrcp.pop %v1340
  %v1345 = vmul.f32 1.0, %v1344
  %v1346 = vrcp.pop %v1341
  %v1347 = vmul.f32 1.0, %v1346
  %v1348 = vtanh.pop %v1329
  %v1349 = vmul.f32 %v1345, %v1236
  %v1350 = vmul.f32 %v1343, %v1348
  %v1351 = vadd.f32 %v1349, %v1350
  %v1352 = vtanh.pop %v1351
  %v1353 = vmul.f32 %v1347, %v1352
  %v1354 = vld [vmem:[#allocation2 + $0xe0] sm:$0xff]
  %v1355 = vld [vmem:[#allocation2 + $0xe8] sm:$0xff]
  %v1356 = vld [vmem:[#allocation2 + $0xf0] sm:$0xff]
  %v1357 = vld [vmem:[#allocation2 + $0xf8] sm:$0xff]
  %v1358 = vpack.c.bf16 %v1353, %v1353
  %1359 = vmatprep.subr.bf16.mxu0 %v519
  %1360 = vmatpush1.bf16.msra.mxu0 %v518
  %1361 = vmatprep.subr.bf16.mxu0 %v515
  %1362 = vmatpush1.bf16.msra.mxu0 %v514
  %1363 = vmatprep.subr.bf16.mxu0 %v511
  %1364 = vmatpush1.bf16.msra.mxu0 %v510
  %1365 = vmatprep.subr.bf16.mxu0 %v507
  %1366 = vmatpush1.bf16.msra.mxu0 %v506
  %1367 = vmatprep.subr.bf16.mxu0 %v503
  %1368 = vmatpush1.bf16.msra.mxu0 %v502
  %1369 = vmatprep.subr.bf16.mxu0 %v499
  %1370 = vmatpush1.bf16.msra.mxu0 %v498
  %1371 = vmatprep.subr.bf16.mxu0 %v495
  %1372 = vmatpush1.bf16.msra.mxu0 %v494
  %1373 = vmatprep.subr.bf16.mxu0 %v491
  %1374 = vmatpush1.bf16.msra.mxu0 %v490
  %1375 = vmatprep.subr.bf16.mxu0 0
  %1376 = vmatpush2.bf16.msra.mxu0 0
  %1377 = vmatprep.subr.bf16.mxu0 0
  %1378 = vmatpush2.bf16.msra.mxu0 0
  %1379 = vmatprep.subr.bf16.mxu0 0
  %1380 = vmatpush2.bf16.msra.mxu0 0
  %1381 = vmatprep.subr.bf16.mxu0 0
  %1382 = vmatpush2.bf16.msra.mxu0 0
  %1383 = vmatprep.subr.bf16.mxu0 0
  %1384 = vmatpush2.bf16.msra.mxu0 0
  %1385 = vmatprep.subr.bf16.mxu0 0
  %1386 = vmatpush2.bf16.msra.mxu0 0
  %1387 = vmatprep.subr.bf16.mxu0 0
  %1388 = vmatpush2.bf16.msra.mxu0 0
  %1389 = vmatprep.subr.bf16.mxu0 0
  %1390 = vmatpush2.bf16.msra.mxu0 0
  %1391 = vmatprep.mubr.bf16.mxu0 0
  %1392 = vmatmul.mubr.bf16.gmra.mxu0 %v1358
  %v1393 = vpop.f32.mrf.mxu0
  %v1394 = vadd.f32 0.0, %v1393
  %v1395 = vpop.f32.mrf.mxu0
  %v1396 = vadd.f32 0.0, %v1395
  %v1397 = vpop.f32.mrf.mxu0
  %v1398 = vpop.f32.mrf.mxu0
  %1399 = vdwg.mxu0
  %1400 = vmatprep.subr.bf16.mxu0 %v521
  %1401 = vmatpush1.bf16.msra.mxu0 %v520
  %1402 = vmatprep.subr.bf16.mxu0 %v517
  %1403 = vmatpush1.bf16.msra.mxu0 %v516
  %1404 = vmatprep.subr.bf16.mxu0 %v513
  %1405 = vmatpush1.bf16.msra.mxu0 %v512
  %1406 = vmatprep.subr.bf16.mxu0 %v509
  %1407 = vmatpush1.bf16.msra.mxu0 %v508
  %1408 = vmatprep.subr.bf16.mxu0 %v505
  %1409 = vmatpush1.bf16.msra.mxu0 %v504
  %1410 = vmatprep.subr.bf16.mxu0 %v501
  %1411 = vmatpush1.bf16.msra.mxu0 %v500
  %1412 = vmatprep.subr.bf16.mxu0 %v497
  %1413 = vmatpush1.bf16.msra.mxu0 %v496
  %1414 = vmatprep.subr.bf16.mxu0 %v493
  %1415 = vmatpush1.bf16.msra.mxu0 %v492
  %1416 = vmatprep.subr.bf16.mxu0 0
  %1417 = vmatpush2.bf16.msra.mxu0 0
  %1418 = vmatprep.subr.bf16.mxu0 0
  %1419 = vmatpush2.bf16.msra.mxu0 0
  %1420 = vmatprep.subr.bf16.mxu0 0
  %1421 = vmatpush2.bf16.msra.mxu0 0
  %1422 = vmatprep.subr.bf16.mxu0 0
  %1423 = vmatpush2.bf16.msra.mxu0 0
  %1424 = vmatprep.subr.bf16.mxu0 0
  %1425 = vmatpush2.bf16.msra.mxu0 0
  %1426 = vmatprep.subr.bf16.mxu0 0
  %1427 = vmatpush2.bf16.msra.mxu0 0
  %1428 = vmatprep.subr.bf16.mxu0 0
  %1429 = vmatpush2.bf16.msra.mxu0 0
  %1430 = vmatprep.subr.bf16.mxu0 0
  %1431 = vmatpush2.bf16.msra.mxu0 0
  %1432 = vmatprep.mubr.bf16.mxu0 0
  %1433 = vmatmul.mubr.bf16.gmra.mxu0 %v1358
  %v1434 = vpop.f32.mrf.mxu0
  %v1435 = vadd.f32 0.0, %v1434
  %v1436 = vpop.f32.mrf.mxu0
  %v1437 = vadd.f32 0.0, %v1436
  %v1438 = vpop.f32.mrf.mxu0
  %v1439 = vpop.f32.mrf.mxu0
  %1440 = vdwg.mxu0
  %v1441 = vadd.f32 %v1354, %v1394
  %v1442 = vadd.f32 %v1355, %v1396
  %v1443 = vadd.f32 %v1356, %v1435
  %v1444 = vadd.f32 %v1357, %v1437
  %v1445 = vxor.u32 %v1441, 2147483648
  %v1446 = vxor.u32 %v1442, 2147483648
  %v1447 = vxor.u32 %v1443, 2147483648
  %v1448 = vmul.f32 %v1445, 1.442695
  %v1449 = vpow.pop %v1448
  %v1450 = vmul.f32 %v1446, 1.442695
  %v1451 = vpow.pop %v1450
  %v1452 = vmul.f32 %v1447, 1.442695
  %v1453 = vpow.pop %v1452
  %v1454 = vadd.f32 %v1449, 1.0
  %v1455 = vadd.f32 %v1451, 1.0
  %v1456 = vadd.f32 %v1453, 1.0
  %v1457 = vrcp.pop %v1454
  %v1458 = vmul.f32 1.0, %v1457
  %v1459 = vrcp.pop %v1455
  %v1460 = vmul.f32 1.0, %v1459
  %v1461 = vrcp.pop %v1456
  %v1462 = vmul.f32 1.0, %v1461
  %v1463 = vtanh.pop %v1444
  %v1464 = vmul.f32 %v1460, %v1351
  %v1465 = vmul.f32 %v1458, %v1463
  %v1466 = vadd.f32 %v1464, %v1465
  %v1467 = vtanh.pop %v1466
  %v1468 = vmul.f32 %v1462, %v1467
  %v1469 = vmax.f32 %v1468, 0.0
  %v1470 = vld [vmem:[%s4] sm:$0xff]
  %v1471 = vld [vmem:[%s4 + $0x8] sm:$0xff]
  %v1472 = vld [vmem:[%s4 + $0x10] sm:$0xff]
  %v1473 = vld [vmem:[%s4 + $0x18] sm:$0xff]
  %v1474 = vld [vmem:[%s4 + $0x20] sm:$0xff]
  %v1475 = vld [vmem:[%s4 + $0x28] sm:$0xff]
  %v1476 = vld [vmem:[%s4 + $0x30] sm:$0xff]
  %v1477 = vld [vmem:[%s4 + $0x38] sm:$0xff]
  %v1478 = vld [vmem:[%s4 + $0x40] sm:$0xff]
  %v1479 = vld [vmem:[%s4 + $0x48] sm:$0xff]
  %v1480 = vld [vmem:[%s4 + $0x50] sm:$0xff]
  %v1481 = vld [vmem:[%s4 + $0x58] sm:$0xff]
  %v1482 = vld [vmem:[%s4 + $0x60] sm:$0xff]
  %v1483 = vld [vmem:[%s4 + $0x68] sm:$0xff]
  %v1484 = vld [vmem:[%s4 + $0x70] sm:$0xff]
  %v1485 = vld [vmem:[%s4 + $0x78] sm:$0xff]
  %v1486 = vld [vmem:[%s5] sm:$0x1]
  %v1488 = vlaneseq
  %v1489 = vshrl.u32 %v1488, 7
  %v1490 = vsub.s32 0, %v1489
  %v1491 = vrot.slane %v1486, %v1490
  %1493 = vmatprep.subr.mxu0 0.0
  %1494 = vmatpush1.msra.mxu0 %v1485
  %1495 = vmatprep.subr.mxu0 0.0
  %1496 = vmatpush1.msra.mxu0 %v1484
  %1497 = vmatprep.subr.mxu0 0.0
  %1498 = vmatpush1.msra.mxu0 %v1483
  %1499 = vmatprep.subr.mxu0 0.0
  %1500 = vmatpush1.msra.mxu0 %v1482
  %1501 = vmatprep.subr.mxu0 0.0
  %1502 = vmatpush1.msra.mxu0 %v1481
  %1503 = vmatprep.subr.mxu0 0.0
  %1504 = vmatpush1.msra.mxu0 %v1480
  %1505 = vmatprep.subr.mxu0 0.0
  %1506 = vmatpush1.msra.mxu0 %v1479
  %1507 = vmatprep.subr.mxu0 0.0
  %1508 = vmatpush1.msra.mxu0 %v1478
  %1509 = vmatprep.subr.mxu0 0.0
  %1510 = vmatpush1.msra.mxu0 %v1477
  %1511 = vmatprep.subr.mxu0 0.0
  %1512 = vmatpush1.msra.mxu0 %v1476
  %1513 = vmatprep.subr.mxu0 0.0
  %1514 = vmatpush1.msra.mxu0 %v1475
  %1515 = vmatprep.subr.mxu0 0.0
  %1516 = vmatpush1.msra.mxu0 %v1474
  %1517 = vmatprep.subr.mxu0 0.0
  %1518 = vmatpush1.msra.mxu0 %v1473
  %1519 = vmatprep.subr.mxu0 0.0
  %1520 = vmatpush1.msra.mxu0 %v1472
  %1521 = vmatprep.subr.mxu0 0.0
  %1522 = vmatpush1.msra.mxu0 %v1471
  %1523 = vmatprep.subr.mxu0 0.0
  %1524 = vmatpush1.msra.mxu0 %v1470
  %1525 = vmatprep.subr.mxu0 0.0
  %1526 = vmatpush2.msra.mxu0 0.0
  %1527 = vmatprep.subr.mxu0 0.0
  %1528 = vmatpush2.msra.mxu0 0.0
  %1529 = vmatprep.subr.mxu0 0.0
  %1530 = vmatpush2.msra.mxu0 0.0
  %1531 = vmatprep.subr.mxu0 0.0
  %1532 = vmatpush2.msra.mxu0 0.0
  %1533 = vmatprep.subr.mxu0 0.0
  %1534 = vmatpush2.msra.mxu0 0.0
  %1535 = vmatprep.subr.mxu0 0.0
  %1536 = vmatpush2.msra.mxu0 0.0
  %1537 = vmatprep.subr.mxu0 0.0
  %1538 = vmatpush2.msra.mxu0 0.0
  %1539 = vmatprep.subr.mxu0 0.0
  %1540 = vmatpush2.msra.mxu0 0.0
  %1541 = vmatprep.subr.mxu0 0.0
  %1542 = vmatpush2.msra.mxu0 0.0
  %1543 = vmatprep.subr.mxu0 0.0
  %1544 = vmatpush2.msra.mxu0 0.0
  %1545 = vmatprep.subr.mxu0 0.0
  %1546 = vmatpush2.msra.mxu0 0.0
  %1547 = vmatprep.subr.mxu0 0.0
  %1548 = vmatpush2.msra.mxu0 0.0
  %1549 = vmatprep.subr.mxu0 0.0
  %1550 = vmatpush2.msra.mxu0 0.0
  %1551 = vmatprep.subr.mxu0 0.0
  %1552 = vmatpush2.msra.mxu0 0.0
  %1553 = vmatprep.subr.mxu0 0.0
  %1554 = vmatpush2.msra.mxu0 0.0
  %1555 = vmatprep.subr.mxu0 0.0
  %1556 = vmatpush2.msra.mxu0 0.0
  %1557 = vmatprep.mubr.f32.mxu0 0.0
  %1558 = vmatmul.mubr.f32.gmra.mxu0 %v1469
  %v1559 = vpop.f32.mrf.mxu0
  %v1560 = vadd.f32 %v1491, %v1559
  %v1561 = vpop.f32.mrf.mxu0
  %1562 = vdwg.mxu0
  %v1563 = vmax.f32 %v1560, 0.0
  %v1564 = vld [vmem:[%s6] sm:$0xff]
  %v1565 = vld [vmem:[%s6 + $0x8] sm:$0xff]
  %v1566 = vld [vmem:[%s6 + $0x10] sm:$0xff]
  %v1567 = vld [vmem:[%s6 + $0x18] sm:$0xff]
  %v1568 = vld [vmem:[%s6 + $0x20] sm:$0xff]
  %v1569 = vld [vmem:[%s6 + $0x28] sm:$0xff]
  %v1570 = vld [vmem:[%s6 + $0x30] sm:$0xff]
  %v1571 = vld [vmem:[%s6 + $0x38] sm:$0xff]
  %v1572 = vld [vmem:[%s6 + $0x40] sm:$0xff]
  %v1573 = vld [vmem:[%s6 + $0x48] sm:$0xff]
  %v1574 = vld [vmem:[%s6 + $0x50] sm:$0xff]
  %v1575 = vld [vmem:[%s6 + $0x58] sm:$0xff]
  %v1576 = vld [vmem:[%s6 + $0x60] sm:$0xff]
  %v1577 = vld [vmem:[%s6 + $0x68] sm:$0xff]
  %v1578 = vld [vmem:[%s6 + $0x70] sm:$0xff]
  %v1579 = vld [vmem:[%s6 + $0x78] sm:$0xff]
  %v1580 = vld [vmem:[%s7] sm:$0x1]
  %v1582 = vlaneseq
  %v1583 = vshrl.u32 %v1582, 7
  %v1584 = vsub.s32 0, %v1583
  %v1585 = vrot.slane %v1580, %v1584
  %1587 = vmatprep.subr.mxu0 0.0
  %1588 = vmatpush1.msra.mxu0 %v1579
  %1589 = vmatprep.subr.mxu0 0.0
  %1590 = vmatpush1.msra.mxu0 %v1578
  %1591 = vmatprep.subr.mxu0 0.0
  %1592 = vmatpush1.msra.mxu0 %v1577
  %1593 = vmatprep.subr.mxu0 0.0
  %1594 = vmatpush1.msra.mxu0 %v1576
  %1595 = vmatprep.subr.mxu0 0.0
  %1596 = vmatpush1.msra.mxu0 %v1575
  %1597 = vmatprep.subr.mxu0 0.0
  %1598 = vmatpush1.msra.mxu0 %v1574
  %1599 = vmatprep.subr.mxu0 0.0
  %1600 = vmatpush1.msra.mxu0 %v1573
  %1601 = vmatprep.subr.mxu0 0.0
  %1602 = vmatpush1.msra.mxu0 %v1572
  %1603 = vmatprep.subr.mxu0 0.0
  %1604 = vmatpush1.msra.mxu0 %v1571
  %1605 = vmatprep.subr.mxu0 0.0
  %1606 = vmatpush1.msra.mxu0 %v1570
  %1607 = vmatprep.subr.mxu0 0.0
  %1608 = vmatpush1.msra.mxu0 %v1569
  %1609 = vmatprep.subr.mxu0 0.0
  %1610 = vmatpush1.msra.mxu0 %v1568
  %1611 = vmatprep.subr.mxu0 0.0
  %1612 = vmatpush1.msra.mxu0 %v1567
  %1613 = vmatprep.subr.mxu0 0.0
  %1614 = vmatpush1.msra.mxu0 %v1566
  %1615 = vmatprep.subr.mxu0 0.0
  %1616 = vmatpush1.msra.mxu0 %v1565
  %1617 = vmatprep.subr.mxu0 0.0
  %1618 = vmatpush1.msra.mxu0 %v1564
  %1619 = vmatprep.subr.mxu0 0.0
  %1620 = vmatpush2.msra.mxu0 0.0
  %1621 = vmatprep.subr.mxu0 0.0
  %1622 = vmatpush2.msra.mxu0 0.0
  %1623 = vmatprep.subr.mxu0 0.0
  %1624 = vmatpush2.msra.mxu0 0.0
  %1625 = vmatprep.subr.mxu0 0.0
  %1626 = vmatpush2.msra.mxu0 0.0
  %1627 = vmatprep.subr.mxu0 0.0
  %1628 = vmatpush2.msra.mxu0 0.0
  %1629 = vmatprep.subr.mxu0 0.0
  %1630 = vmatpush2.msra.mxu0 0.0
  %1631 = vmatprep.subr.mxu0 0.0
  %1632 = vmatpush2.msra.mxu0 0.0
  %1633 = vmatprep.subr.mxu0 0.0
  %1634 = vmatpush2.msra.mxu0 0.0
  %1635 = vmatprep.subr.mxu0 0.0
  %1636 = vmatpush2.msra.mxu0 0.0
  %1637 = vmatprep.subr.mxu0 0.0
  %1638 = vmatpush2.msra.mxu0 0.0
  %1639 = vmatprep.subr.mxu0 0.0
  %1640 = vmatpush2.msra.mxu0 0.0
  %1641 = vmatprep.subr.mxu0 0.0
  %1642 = vmatpush2.msra.mxu0 0.0
  %1643 = vmatprep.subr.mxu0 0.0
  %1644 = vmatpush2.msra.mxu0 0.0
  %1645 = vmatprep.subr.mxu0 0.0
  %1646 = vmatpush2.msra.mxu0 0.0
  %1647 = vmatprep.subr.mxu0 0.0
  %1648 = vmatpush2.msra.mxu0 0.0
  %1649 = vmatprep.subr.mxu0 0.0
  %1650 = vmatpush2.msra.mxu0 0.0
  %1651 = vmatprep.mubr.f32.mxu0 0.0
  %1652 = vmatmul.mubr.f32.gmra.mxu0 %v1563
  %v1653 = vpop.f32.mrf.mxu0
  %v1654 = vadd.f32 %v1585, %v1653
  %v1655 = vpop.f32.mrf.mxu0
  %1656 = vdwg.mxu0
  %1657 = vst [vmem:[%s8] sm:$0xff] %v1654
  // Predicated region
  $region34: #{lstm_forward.1} parent=0 // pred_check
    _
  $region35: #{lstm_forward.1} parent=0 // pred_check_branch
    %1659 = sbr.rel (0) target = $region37
  $region36: #{lstm_forward.1} parent=0 // pred_region
    _
  $region37: #{lstm_forward.1} parent=0 // pred_fallthru
    _
  // Predicated region
  $region38: #{lstm_forward.1} parent=0 // pred_check
    _
  $region39: #{lstm_forward.1} parent=0 // pred_check_branch
    %1661 = sbr.rel (0) target = $region41
  $region40: #{lstm_forward.1} parent=0 // pred_region
    _
  $region41: #{lstm_forward.1} parent=0 // pred_fallthru
    _

</llo_original>
